<compile_context>
chip_gen: v5e
topology: v5e:2x2
jax: 0.10.0
libtpu: 0.0.40
codegen_flags: <defaults>
</compile_context>

<pallas_src>
import functools

import jax
import jax.numpy as jnp
from jax import lax
from jax.experimental import pallas as pl
from jax.experimental.pallas import tpu as pltpu


def _round_up(x, m):
    return (x + m - 1) // m * m


def _pad_gate_rows(w, H, Hp):
    """w: (4H, ...) -> (4*Hp, ...), zero-padding each PyTorch gate block [i,f,g,o]."""
    if Hp == H:
        return w
    pad = [(0, Hp - H)] + [(0, 0)] * (w.ndim - 1)
    return jnp.concatenate(
        [jnp.pad(w[k * H:(k + 1) * H], pad) for k in range(4)], axis=0)


def _sigmoid_tanh(x):
    # sigmoid(x) = 0.5*tanh(0.5*x) + 0.5 : a single EUP push + cheap VPU ops.
    return 0.5 * jnp.tanh(0.5 * x) + 0.5


def lstm_classifier_kernel(xproj_ref, whh_ref, whead_ref, bhead_ref,
                           out_ref, h_scr, c_scr, *, seq_len, mask_tail):
    """One (batch-block, time-chunk) grid step; transposed batch-on-lanes layout.

    xproj_ref: (T_CHUNK, 4*Hp, B_BLK) bf16  precomputed x @ W_ih^T + (b_ih+b_hh)
    whh_ref:   (4*Hp, Hp)             bf16  gate-padded W_hh (PyTorch layout)
    whead_ref: (N_PAD, Hp)            bf16  4 heads packed along rows
    bhead_ref: (N_PAD, 1)             f32
    out_ref:   (N_PAD, B_BLK)         bf16  packed transposed logits (rows 0..9 valid)
    h_scr/c_scr: (Hp, B_BLK)          f32   recurrent state, persists across time chunks
    """
    tt = pl.program_id(1)
    T_CHUNK = xproj_ref.shape[0]
    Hp = whh_ref.shape[1]

    @pl.when(tt == 0)
    def _():
        h_scr[...] = jnp.zeros_like(h_scr)
        c_scr[...] = jnp.zeros_like(c_scr)

    whh = whh_ref[...]                                    # loop-invariant weights

    def step(t, carry):
        h_prev, c_prev = carry
        # Recurrent matmul: (4Hp, Hp) @ (Hp, B_BLK); contraction = Hp (no pad waste).
        gates = xproj_ref[t].astype(jnp.float32) + jnp.dot(
            whh, h_prev.astype(whh.dtype), preferred_element_type=jnp.float32)
        # Sublane-aligned gate row blocks (Hp is a multiple of 8).
        i_g = _sigmoid_tanh(gates[0 * Hp:1 * Hp, :])
        f_g = _sigmoid_tanh(gates[1 * Hp:2 * Hp, :])
        g_g = jnp.tanh(gates[2 * Hp:3 * Hp, :])
        o_g = _sigmoid_tanh(gates[3 * Hp:4 * Hp, :])
        c_new = f_g * c_prev + i_g * g_g                  # f32 cell state
        h_new = o_g * jnp.tanh(c_new)
        if mask_tail:                                     # static; only when T % T_CHUNK != 0
            keep = tt * T_CHUNK + t < seq_len
            h_new = jnp.where(keep, h_new, h_prev)
            c_new = jnp.where(keep, c_new, c_prev)
        return h_new, c_new

    h, c = lax.fori_loop(0, T_CHUNK, step, (h_scr[...], c_scr[...]), unroll=True)
    h_scr[...] = h
    c_scr[...] = c

    @pl.when(tt == pl.num_programs(1) - 1)
    def _():
        # All four heads fused: (N_PAD, Hp) @ (Hp, B_BLK) -> lane-dense store.
        logits = jnp.dot(whead_ref[...], h.astype(whead_ref.dtype),
                         preferred_element_type=jnp.float32) + bhead_ref[...]
        out_ref[...] = logits.astype(out_ref.dtype)


def lstm_classifier_forward(x, params):
    """x: (B, T, 6) bf16 -> (gender (B,2), hold (B,2), play_years (B,3), level (B,3))."""
    B, T, I = x.shape
    H = params["w_hh"].shape[1]                 # w_hh: (4H, H)
    f32 = jnp.float32
    cdtype = x.dtype

    Hp = _round_up(H, 8)                        # hidden lives on sublanes: 8-align only
    N_PAD = 16                                  # 10 packed logits -> one (16, 128) tile

    # --- batch blocking: batch lives on lanes -> blocks are multiples of 128 --
    B_BLK = min(_round_up(-(-B // 2), 128), 256)   # >=2 blocks when B>128 (v7x megacore)
    B_pad = _round_up(B, B_BLK)

    # --- time chunking: serial recurrence streamed through the grid ----------
    T_CHUNK = min(T, 16)                        # full unroll only within a small chunk
    T_pad = _round_up(T, T_CHUNK)
    mask_tail = (T_pad != T)

    # --- LSTM weights, gate-block padded (PyTorch order [i,f,g,o]) -----------
    whh = _pad_gate_rows(params["w_hh"], H, Hp)                       # (4Hp, H)
    whh = jnp.pad(whh, ((0, 0), (0, Hp - H))).astype(cdtype)          # (4Hp, Hp)
    wih = _pad_gate_rows(params["w_ih"], H, Hp).astype(f32)           # (4Hp, I)
    b = _pad_gate_rows(
        (params["b_ih"].astype(f32) + params["b_hh"].astype(f32))[:, None],
        H, Hp)[:, 0]                                                  # (4Hp,)

    # --- hoisted input projection in XLA (K=6 is far too small for the MXU) --
    # xproj[t, :, b] = W_ih @ x[b, t, :] + (b_ih + b_hh), streamed to the kernel in bf16.
    x_p = jnp.pad(x, ((0, B_pad - B), (0, T_pad - T), (0, 0)))
    xproj = (jnp.einsum("gi,bti->tgb", wih, x_p.astype(f32))
             + b[None, :, None]).astype(cdtype)                       # (T_pad, 4Hp, B_pad)

    # --- heads packed along rows: [gender(2), hold(2), years(3), level(3)] ---
    whead = jnp.concatenate([params["w_gender"], params["w_hold"],
                             params["w_years"], params["w_level"]], axis=0)   # (10, H)
    whead = jnp.pad(whead, ((0, N_PAD - whead.shape[0]), (0, Hp - H))).astype(cdtype)
    bhead = jnp.concatenate([params["b_gender"], params["b_hold"],
                             params["b_years"], params["b_level"]]).astype(f32)
    bhead = jnp.pad(bhead, (0, N_PAD - bhead.shape[0]))[:, None]      # (16, 1)

    grid = (B_pad // B_BLK, T_pad // T_CHUNK)

    # --- VMEM budget: double-buffered tiles + state scratch, with margin ------
    est = (2 * T_CHUNK * 4 * Hp * B_BLK * 2            # xproj tiles (bf16)
           + 2 * 4 * Hp * Hp * 2                       # whh
           + 2 * N_PAD * Hp * 2 + 2 * N_PAD * 128 * 4  # heads
           + 2 * N_PAD * B_BLK * 2                     # out tile
           + 2 * Hp * B_BLK * 4)                       # h/c scratch
    vmem_limit = int(min(max(4 * est + (8 << 20), 16 << 20), 48 << 20))

    kernel = functools.partial(lstm_classifier_kernel,
                               seq_len=T, mask_tail=mask_tail)

    out = pl.pallas_call(
        kernel,
        out_shape=jax.ShapeDtypeStruct((N_PAD, B_pad), cdtype),
        grid=grid,
        in_specs=[
            pl.BlockSpec((T_CHUNK, 4 * Hp, B_BLK), lambda bb, tt: (tt, 0, bb)),
            pl.BlockSpec((4 * Hp, Hp), lambda bb, tt: (0, 0)),
            pl.BlockSpec((N_PAD, Hp), lambda bb, tt: (0, 0)),
            pl.BlockSpec((N_PAD, 1), lambda bb, tt: (0, 0)),
        ],
        out_specs=pl.BlockSpec((N_PAD, B_BLK), lambda bb, tt: (0, bb)),
        scratch_shapes=[pltpu.VMEM((Hp, B_BLK), jnp.float32),
                        pltpu.VMEM((Hp, B_BLK), jnp.float32)],
        compiler_params=pltpu.CompilerParams(
            dimension_semantics=("parallel", "arbitrary"),
            vmem_limit_bytes=vmem_limit),
    )(xproj, whh, whead, bhead)

    out = out.T[:B]                              # (B, 16) packed logits
    return out[:, 0:2], out[:, 2:4], out[:, 4:7], out[:, 7:10]


def lstm_classifier_reference(x, params):
    """Pure-JAX reference matching the kernel's precision policy."""
    B, T, I = x.shape
    H = params["w_hh"].shape[1]
    wih = params["w_ih"].T
    whh = params["w_hh"].T
    b = params["b_ih"].astype(jnp.float32) + params["b_hh"].astype(jnp.float32)

    def step(carry, x_t):
        h, c = carry
        gates = (jnp.dot(x_t, wih, preferred_element_type=jnp.float32)
                 + jnp.dot(h.astype(whh.dtype), whh,
                           preferred_element_type=jnp.float32) + b)
        i = jax.nn.sigmoid(gates[:, 0 * H:1 * H])
        f = jax.nn.sigmoid(gates[:, 1 * H:2 * H])
        g = jnp.tanh(gates[:, 2 * H:3 * H])
        o = jax.nn.sigmoid(gates[:, 3 * H:4 * H])
        c = f * c + i * g
        h = o * jnp.tanh(c)
        return (h, c), None

    h0 = jnp.zeros((B, H), jnp.float32)
    c0 = jnp.zeros((B, H), jnp.float32)
    (h, _), _ = lax.scan(step, (h0, c0), jnp.transpose(x, (1, 0, 2)))

    def head(wn, bn):
        return (jnp.dot(h.astype(params[wn].dtype), params[wn].T,
                        preferred_element_type=jnp.float32)
                + params[bn].astype(jnp.float32)).astype(x.dtype)

    return (head("w_gender", "b_gender"), head("w_hold", "b_hold"),
            head("w_years", "b_years"), head("w_level", "b_level"))


def init_params(key, hidden_size, input_size=6, dtype=jnp.bfloat16):
    """Deterministic synthetic init matching PyTorch's U(-1/sqrt(H), 1/sqrt(H))."""
    H = hidden_size
    stdv = 1.0 / float(H) ** 0.5
    ks = jax.random.split(key, 12)

    def u(k_, shape):
        return jax.random.uniform(k_, shape, jnp.float32, -stdv, stdv).astype(dtype)

    return {
        # LSTM params (PyTorch layout: (4H, I), (4H, H), (4H,), (4H,))
        "w_ih": u(ks[0], (4 * H, input_size)),
        "w_hh": u(ks[1], (4 * H, H)),
        "b_ih": u(ks[2], (4 * H,)),
        "b_hh": u(ks[3], (4 * H,)),
        # heads (PyTorch Linear layout: (out, in), (out,))
        "w_gender": u(ks[4], (2, H)), "b_gender": u(ks[5], (2,)),
        "w_hold":   u(ks[6], (2, H)), "b_hold":   u(ks[7], (2,)),
        "w_years":  u(ks[8], (3, H)), "b_years":  u(ks[9], (3,)),
        "w_level":  u(ks[10], (3, H)), "b_level": u(ks[11], (3,)),
    }


if __name__ == "__main__":
    B, T, I, H = 2, 8, 6, 32
    key = jax.random.PRNGKey(0)
    pkey, xkey = jax.random.split(key)

    params = init_params(pkey, H, I)
    x = jax.random.normal(xkey, (B, T, I), jnp.float32).astype(jnp.bfloat16)

    fwd = jax.jit(lstm_classifier_forward)
    outs = fwd(x, params)
    jax.block_until_ready(outs)
    gender, hold, years, level = outs

    assert gender.shape == (B, 2) and hold.shape == (B, 2)
    assert years.shape == (B, 3) and level.shape == (B, 3)

    # Correctness check against a pure-JAX reference (loose bf16 tolerance).
    refs = jax.jit(lstm_classifier_reference)(x, params)
    for got, want in zip(outs, refs):
        assert jnp.allclose(got.astype(jnp.float32), want.astype(jnp.float32),
                            atol=5e-2, rtol=5e-2)

    print("KERNEL_OK")
</pallas_src>

<mosaic_0001>
module attributes {stable_mosaic.version = 11 : i64} {
  func.func @lstm_classifier_kernel(%arg0: i32, %arg1: i32, %arg2: memref<8x128x128xbf16, #tpu.memory_space<vmem>>, %arg3: memref<128x32xbf16, #tpu.memory_space<vmem>>, %arg4: memref<16x32xbf16, #tpu.memory_space<vmem>>, %arg5: memref<16x1xf32, #tpu.memory_space<vmem>>, %arg6: memref<16x128xbf16, #tpu.memory_space<vmem>>, %arg7: memref<32x128xf32, #tpu.memory_space<vmem>>, %arg8: memref<32x128xf32, #tpu.memory_space<vmem>>) attributes {dimension_semantics = [#tpu.dimension_semantics<parallel>, #tpu.dimension_semantics<arbitrary>], iteration_bounds = array<i64: 1, 1>, scalar_prefetch = 0 : i64, scratch_operands = 2 : i64, tpu.core_type = #tpu.core_type<tc>, window_params = [{transform_indices = @transform_0, window_bounds = array<i64: 8, 128, 128>}, {pipeline_mode = #tpu.pipeline_mode<synchronous>, transform_indices = @transform_1, window_bounds = array<i64: 128, 32>}, {pipeline_mode = #tpu.pipeline_mode<synchronous>, transform_indices = @transform_2, window_bounds = array<i64: 16, 32>}, {pipeline_mode = #tpu.pipeline_mode<synchronous>, transform_indices = @transform_3, window_bounds = array<i64: 16, 1>}, {transform_indices = @transform_4, window_bounds = array<i64: 16, 128>}]} {
    %c0_i32 = arith.constant 0 : i32
    %0 = arith.cmpi eq, %arg1, %c0_i32 : i32
    %1 = arith.extui %0 : i1 to i32
    %c0_i32_0 = arith.constant 0 : i32
    %2 = arith.cmpi ne, %1, %c0_i32_0 : i32
    scf.if %2 {
      %cst_108 = arith.constant 0.000000e+00 : f32
      %315 = vector.broadcast %cst_108 : f32 to vector<32x128xf32>
      %c0_109 = arith.constant 0 : index
      %c0_110 = arith.constant 0 : index
      %316 = vector.load %arg7[%c0_109, %c0_110] : memref<32x128xf32, #tpu.memory_space<vmem>>, vector<32x128xf32>
      tpu.vector_store %arg7[%c0_109, %c0_110], %315 {strides = array<i32>} : memref<32x128xf32, #tpu.memory_space<vmem>>, vector<32x128xf32>,
      %cst_111 = arith.constant 0.000000e+00 : f32
      %317 = vector.broadcast %cst_111 : f32 to vector<32x128xf32>
      %c0_112 = arith.constant 0 : index
      %c0_113 = arith.constant 0 : index
      %318 = vector.load %arg8[%c0_112, %c0_113] : memref<32x128xf32, #tpu.memory_space<vmem>>, vector<32x128xf32>
      tpu.vector_store %arg8[%c0_112, %c0_113], %317 {strides = array<i32>} : memref<32x128xf32, #tpu.memory_space<vmem>>, vector<32x128xf32>,
    } else {
    }
    %c0 = arith.constant 0 : index
    %c0_1 = arith.constant 0 : index
    %3 = vector.load %arg3[%c0, %c0_1] : memref<128x32xbf16, #tpu.memory_space<vmem>>, vector<128x32xbf16>
    %c0_2 = arith.constant 0 : index
    %c0_3 = arith.constant 0 : index
    %4 = vector.load %arg7[%c0_2, %c0_3] : memref<32x128xf32, #tpu.memory_space<vmem>>, vector<32x128xf32>
    %c0_4 = arith.constant 0 : index
    %c0_5 = arith.constant 0 : index
    %5 = vector.load %arg8[%c0_4, %c0_5] : memref<32x128xf32, #tpu.memory_space<vmem>>, vector<32x128xf32>
    %c0_i32_6 = arith.constant 0 : i32
    %6 = arith.index_cast %c0_i32_6 : i32 to index
    %c0_7 = arith.constant 0 : index
    %c0_8 = arith.constant 0 : index
    %7 = vector.load %arg2[%6, %c0_7, %c0_8] : memref<8x128x128xbf16, #tpu.memory_space<vmem>>, vector<1x128x128xbf16>
    %8 = vector.shape_cast %7 : vector<1x128x128xbf16> to vector<128x128xbf16>
    %9 = arith.extf %8 : vector<128x128xbf16> to vector<128x128xf32>
    %10 = arith.truncf %4 : vector<32x128xf32> to vector<32x128xbf16>
    %cst = arith.constant dense<0.000000e+00> : vector<128x128xf32>
    %11 = tpu.matmul %3, %10, %cst {dimension_numbers = #tpu.dot_dimension_numbers<[1], [0], [0], [1], [0, 0, 1, 1], [], []>} : vector<128x32xbf16>, vector<32x128xbf16>, vector<128x128xf32> -> vector<128x128xf32>
    %12 = arith.addf %9, %11 : vector<128x128xf32>
    %13 = vector.extract_strided_slice %12 {offsets = [0, 0], sizes = [32, 128], strides = [1, 1]} : vector<128x128xf32> to vector<32x128xf32>
    %cst_9 = arith.constant 5.000000e-01 : f32
    %14 = vector.broadcast %cst_9 : f32 to vector<32x128xf32>
    %15 = arith.mulf %14, %13 : vector<32x128xf32>
    %16 = math.tanh %15 : vector<32x128xf32>
    %cst_10 = arith.constant 5.000000e-01 : f32
    %17 = vector.broadcast %cst_10 : f32 to vector<32x128xf32>
    %18 = arith.mulf %17, %16 : vector<32x128xf32>
    %cst_11 = arith.constant 5.000000e-01 : f32
    %19 = vector.broadcast %cst_11 : f32 to vector<32x128xf32>
    %20 = arith.addf %18, %19 : vector<32x128xf32>
    %21 = vector.extract_strided_slice %12 {offsets = [32, 0], sizes = [32, 128], strides = [1, 1]} : vector<128x128xf32> to vector<32x128xf32>
    %cst_12 = arith.constant 5.000000e-01 : f32
    %22 = vector.broadcast %cst_12 : f32 to vector<32x128xf32>
    %23 = arith.mulf %22, %21 : vector<32x128xf32>
    %24 = math.tanh %23 : vector<32x128xf32>
    %cst_13 = arith.constant 5.000000e-01 : f32
    %25 = vector.broadcast %cst_13 : f32 to vector<32x128xf32>
    %26 = arith.mulf %25, %24 : vector<32x128xf32>
    %cst_14 = arith.constant 5.000000e-01 : f32
    %27 = vector.broadcast %cst_14 : f32 to vector<32x128xf32>
    %28 = arith.addf %26, %27 : vector<32x128xf32>
    %29 = vector.extract_strided_slice %12 {offsets = [64, 0], sizes = [32, 128], strides = [1, 1]} : vector<128x128xf32> to vector<32x128xf32>
    %30 = math.tanh %29 : vector<32x128xf32>
    %31 = vector.extract_strided_slice %12 {offsets = [96, 0], sizes = [32, 128], strides = [1, 1]} : vector<128x128xf32> to vector<32x128xf32>
    %cst_15 = arith.constant 5.000000e-01 : f32
    %32 = vector.broadcast %cst_15 : f32 to vector<32x128xf32>
    %33 = arith.mulf %32, %31 : vector<32x128xf32>
    %34 = math.tanh %33 : vector<32x128xf32>
    %cst_16 = arith.constant 5.000000e-01 : f32
    %35 = vector.broadcast %cst_16 : f32 to vector<32x128xf32>
    %36 = arith.mulf %35, %34 : vector<32x128xf32>
    %cst_17 = arith.constant 5.000000e-01 : f32
    %37 = vector.broadcast %cst_17 : f32 to vector<32x128xf32>
    %38 = arith.addf %36, %37 : vector<32x128xf32>
    %39 = arith.mulf %28, %5 : vector<32x128xf32>
    %40 = arith.mulf %20, %30 : vector<32x128xf32>
    %41 = arith.addf %39, %40 : vector<32x128xf32>
    %42 = math.tanh %41 : vector<32x128xf32>
    %43 = arith.mulf %38, %42 : vector<32x128xf32>
    %c1_i32 = arith.constant 1 : i32
    %44 = arith.index_cast %c1_i32 : i32 to index
    %c0_18 = arith.constant 0 : index
    %c0_19 = arith.constant 0 : index
    %45 = vector.load %arg2[%44, %c0_18, %c0_19] : memref<8x128x128xbf16, #tpu.memory_space<vmem>>, vector<1x128x128xbf16>
    %46 = vector.shape_cast %45 : vector<1x128x128xbf16> to vector<128x128xbf16>
    %47 = arith.extf %46 : vector<128x128xbf16> to vector<128x128xf32>
    %48 = arith.truncf %43 : vector<32x128xf32> to vector<32x128xbf16>
    %cst_20 = arith.constant dense<0.000000e+00> : vector<128x128xf32>
    %49 = tpu.matmul %3, %48, %cst_20 {dimension_numbers = #tpu.dot_dimension_numbers<[1], [0], [0], [1], [0, 0, 1, 1], [], []>} : vector<128x32xbf16>, vector<32x128xbf16>, vector<128x128xf32> -> vector<128x128xf32>
    %50 = arith.addf %47, %49 : vector<128x128xf32>
    %51 = vector.extract_strided_slice %50 {offsets = [0, 0], sizes = [32, 128], strides = [1, 1]} : vector<128x128xf32> to vector<32x128xf32>
    %cst_21 = arith.constant 5.000000e-01 : f32
    %52 = vector.broadcast %cst_21 : f32 to vector<32x128xf32>
    %53 = arith.mulf %52, %51 : vector<32x128xf32>
    %54 = math.tanh %53 : vector<32x128xf32>
    %cst_22 = arith.constant 5.000000e-01 : f32
    %55 = vector.broadcast %cst_22 : f32 to vector<32x128xf32>
    %56 = arith.mulf %55, %54 : vector<32x128xf32>
    %cst_23 = arith.constant 5.000000e-01 : f32
    %57 = vector.broadcast %cst_23 : f32 to vector<32x128xf32>
    %58 = arith.addf %56, %57 : vector<32x128xf32>
    %59 = vector.extract_strided_slice %50 {offsets = [32, 0], sizes = [32, 128], strides = [1, 1]} : vector<128x128xf32> to vector<32x128xf32>
    %cst_24 = arith.constant 5.000000e-01 : f32
    %60 = vector.broadcast %cst_24 : f32 to vector<32x128xf32>
    %61 = arith.mulf %60, %59 : vector<32x128xf32>
    %62 = math.tanh %61 : vector<32x128xf32>
    %cst_25 = arith.constant 5.000000e-01 : f32
    %63 = vector.broadcast %cst_25 : f32 to vector<32x128xf32>
    %64 = arith.mulf %63, %62 : vector<32x128xf32>
    %cst_26 = arith.constant 5.000000e-01 : f32
    %65 = vector.broadcast %cst_26 : f32 to vector<32x128xf32>
    %66 = arith.addf %64, %65 : vector<32x128xf32>
    %67 = vector.extract_strided_slice %50 {offsets = [64, 0], sizes = [32, 128], strides = [1, 1]} : vector<128x128xf32> to vector<32x128xf32>
    %68 = math.tanh %67 : vector<32x128xf32>
    %69 = vector.extract_strided_slice %50 {offsets = [96, 0], sizes = [32, 128], strides = [1, 1]} : vector<128x128xf32> to vector<32x128xf32>
    %cst_27 = arith.constant 5.000000e-01 : f32
    %70 = vector.broadcast %cst_27 : f32 to vector<32x128xf32>
    %71 = arith.mulf %70, %69 : vector<32x128xf32>
    %72 = math.tanh %71 : vector<32x128xf32>
    %cst_28 = arith.constant 5.000000e-01 : f32
    %73 = vector.broadcast %cst_28 : f32 to vector<32x128xf32>
    %74 = arith.mulf %73, %72 : vector<32x128xf32>
    %cst_29 = arith.constant 5.000000e-01 : f32
    %75 = vector.broadcast %cst_29 : f32 to vector<32x128xf32>
    %76 = arith.addf %74, %75 : vector<32x128xf32>
    %77 = arith.mulf %66, %41 : vector<32x128xf32>
    %78 = arith.mulf %58, %68 : vector<32x128xf32>
    %79 = arith.addf %77, %78 : vector<32x128xf32>
    %80 = math.tanh %79 : vector<32x128xf32>
    %81 = arith.mulf %76, %80 : vector<32x128xf32>
    %c2_i32 = arith.constant 2 : i32
    %82 = arith.index_cast %c2_i32 : i32 to index
    %c0_30 = arith.constant 0 : index
    %c0_31 = arith.constant 0 : index
    %83 = vector.load %arg2[%82, %c0_30, %c0_31] : memref<8x128x128xbf16, #tpu.memory_space<vmem>>, vector<1x128x128xbf16>
    %84 = vector.shape_cast %83 : vector<1x128x128xbf16> to vector<128x128xbf16>
    %85 = arith.extf %84 : vector<128x128xbf16> to vector<128x128xf32>
    %86 = arith.truncf %81 : vector<32x128xf32> to vector<32x128xbf16>
    %cst_32 = arith.constant dense<0.000000e+00> : vector<128x128xf32>
    %87 = tpu.matmul %3, %86, %cst_32 {dimension_numbers = #tpu.dot_dimension_numbers<[1], [0], [0], [1], [0, 0, 1, 1], [], []>} : vector<128x32xbf16>, vector<32x128xbf16>, vector<128x128xf32> -> vector<128x128xf32>
    %88 = arith.addf %85, %87 : vector<128x128xf32>
    %89 = vector.extract_strided_slice %88 {offsets = [0, 0], sizes = [32, 128], strides = [1, 1]} : vector<128x128xf32> to vector<32x128xf32>
    %cst_33 = arith.constant 5.000000e-01 : f32
    %90 = vector.broadcast %cst_33 : f32 to vector<32x128xf32>
    %91 = arith.mulf %90, %89 : vector<32x128xf32>
    %92 = math.tanh %91 : vector<32x128xf32>
    %cst_34 = arith.constant 5.000000e-01 : f32
    %93 = vector.broadcast %cst_34 : f32 to vector<32x128xf32>
    %94 = arith.mulf %93, %92 : vector<32x128xf32>
    %cst_35 = arith.constant 5.000000e-01 : f32
    %95 = vector.broadcast %cst_35 : f32 to vector<32x128xf32>
    %96 = arith.addf %94, %95 : vector<32x128xf32>
    %97 = vector.extract_strided_slice %88 {offsets = [32, 0], sizes = [32, 128], strides = [1, 1]} : vector<128x128xf32> to vector<32x128xf32>
    %cst_36 = arith.constant 5.000000e-01 : f32
    %98 = vector.broadcast %cst_36 : f32 to vector<32x128xf32>
    %99 = arith.mulf %98, %97 : vector<32x128xf32>
    %100 = math.tanh %99 : vector<32x128xf32>
    %cst_37 = arith.constant 5.000000e-01 : f32
    %101 = vector.broadcast %cst_37 : f32 to vector<32x128xf32>
    %102 = arith.mulf %101, %100 : vector<32x128xf32>
    %cst_38 = arith.constant 5.000000e-01 : f32
    %103 = vector.broadcast %cst_38 : f32 to vector<32x128xf32>
    %104 = arith.addf %102, %103 : vector<32x128xf32>
    %105 = vector.extract_strided_slice %88 {offsets = [64, 0], sizes = [32, 128], strides = [1, 1]} : vector<128x128xf32> to vector<32x128xf32>
    %106 = math.tanh %105 : vector<32x128xf32>
    %107 = vector.extract_strided_slice %88 {offsets = [96, 0], sizes = [32, 128], strides = [1, 1]} : vector<128x128xf32> to vector<32x128xf32>
    %cst_39 = arith.constant 5.000000e-01 : f32
    %108 = vector.broadcast %cst_39 : f32 to vector<32x128xf32>
    %109 = arith.mulf %108, %107 : vector<32x128xf32>
    %110 = math.tanh %109 : vector<32x128xf32>
    %cst_40 = arith.constant 5.000000e-01 : f32
    %111 = vector.broadcast %cst_40 : f32 to vector<32x128xf32>
    %112 = arith.mulf %111, %110 : vector<32x128xf32>
    %cst_41 = arith.constant 5.000000e-01 : f32
    %113 = vector.broadcast %cst_41 : f32 to vector<32x128xf32>
    %114 = arith.addf %112, %113 : vector<32x128xf32>
    %115 = arith.mulf %104, %79 : vector<32x128xf32>
    %116 = arith.mulf %96, %106 : vector<32x128xf32>
    %117 = arith.addf %115, %116 : vector<32x128xf32>
    %118 = math.tanh %117 : vector<32x128xf32>
    %119 = arith.mulf %114, %118 : vector<32x128xf32>
    %c3_i32 = arith.constant 3 : i32
    %120 = arith.index_cast %c3_i32 : i32 to index
    %c0_42 = arith.constant 0 : index
    %c0_43 = arith.constant 0 : index
    %121 = vector.load %arg2[%120, %c0_42, %c0_43] : memref<8x128x128xbf16, #tpu.memory_space<vmem>>, vector<1x128x128xbf16>
    %122 = vector.shape_cast %121 : vector<1x128x128xbf16> to vector<128x128xbf16>
    %123 = arith.extf %122 : vector<128x128xbf16> to vector<128x128xf32>
    %124 = arith.truncf %119 : vector<32x128xf32> to vector<32x128xbf16>
    %cst_44 = arith.constant dense<0.000000e+00> : vector<128x128xf32>
    %125 = tpu.matmul %3, %124, %cst_44 {dimension_numbers = #tpu.dot_dimension_numbers<[1], [0], [0], [1], [0, 0, 1, 1], [], []>} : vector<128x32xbf16>, vector<32x128xbf16>, vector<128x128xf32> -> vector<128x128xf32>
    %126 = arith.addf %123, %125 : vector<128x128xf32>
    %127 = vector.extract_strided_slice %126 {offsets = [0, 0], sizes = [32, 128], strides = [1, 1]} : vector<128x128xf32> to vector<32x128xf32>
    %cst_45 = arith.constant 5.000000e-01 : f32
    %128 = vector.broadcast %cst_45 : f32 to vector<32x128xf32>
    %129 = arith.mulf %128, %127 : vector<32x128xf32>
    %130 = math.tanh %129 : vector<32x128xf32>
    %cst_46 = arith.constant 5.000000e-01 : f32
    %131 = vector.broadcast %cst_46 : f32 to vector<32x128xf32>
    %132 = arith.mulf %131, %130 : vector<32x128xf32>
    %cst_47 = arith.constant 5.000000e-01 : f32
    %133 = vector.broadcast %cst_47 : f32 to vector<32x128xf32>
    %134 = arith.addf %132, %133 : vector<32x128xf32>
    %135 = vector.extract_strided_slice %126 {offsets = [32, 0], sizes = [32, 128], strides = [1, 1]} : vector<128x128xf32> to vector<32x128xf32>
    %cst_48 = arith.constant 5.000000e-01 : f32
    %136 = vector.broadcast %cst_48 : f32 to vector<32x128xf32>
    %137 = arith.mulf %136, %135 : vector<32x128xf32>
    %138 = math.tanh %137 : vector<32x128xf32>
    %cst_49 = arith.constant 5.000000e-01 : f32
    %139 = vector.broadcast %cst_49 : f32 to vector<32x128xf32>
    %140 = arith.mulf %139, %138 : vector<32x128xf32>
    %cst_50 = arith.constant 5.000000e-01 : f32
    %141 = vector.broadcast %cst_50 : f32 to vector<32x128xf32>
    %142 = arith.addf %140, %141 : vector<32x128xf32>
    %143 = vector.extract_strided_slice %126 {offsets = [64, 0], sizes = [32, 128], strides = [1, 1]} : vector<128x128xf32> to vector<32x128xf32>
    %144 = math.tanh %143 : vector<32x128xf32>
    %145 = vector.extract_strided_slice %126 {offsets = [96, 0], sizes = [32, 128], strides = [1, 1]} : vector<128x128xf32> to vector<32x128xf32>
    %cst_51 = arith.constant 5.000000e-01 : f32
    %146 = vector.broadcast %cst_51 : f32 to vector<32x128xf32>
    %147 = arith.mulf %146, %145 : vector<32x128xf32>
    %148 = math.tanh %147 : vector<32x128xf32>
    %cst_52 = arith.constant 5.000000e-01 : f32
    %149 = vector.broadcast %cst_52 : f32 to vector<32x128xf32>
    %150 = arith.mulf %149, %148 : vector<32x128xf32>
    %cst_53 = arith.constant 5.000000e-01 : f32
    %151 = vector.broadcast %cst_53 : f32 to vector<32x128xf32>
    %152 = arith.addf %150, %151 : vector<32x128xf32>
    %153 = arith.mulf %142, %117 : vector<32x128xf32>
    %154 = arith.mulf %134, %144 : vector<32x128xf32>
    %155 = arith.addf %153, %154 : vector<32x128xf32>
    %156 = math.tanh %155 : vector<32x128xf32>
    %157 = arith.mulf %152, %156 : vector<32x128xf32>
    %c4_i32 = arith.constant 4 : i32
    %158 = arith.index_cast %c4_i32 : i32 to index
    %c0_54 = arith.constant 0 : index
    %c0_55 = arith.constant 0 : index
    %159 = vector.load %arg2[%158, %c0_54, %c0_55] : memref<8x128x128xbf16, #tpu.memory_space<vmem>>, vector<1x128x128xbf16>
    %160 = vector.shape_cast %159 : vector<1x128x128xbf16> to vector<128x128xbf16>
    %161 = arith.extf %160 : vector<128x128xbf16> to vector<128x128xf32>
    %162 = arith.truncf %157 : vector<32x128xf32> to vector<32x128xbf16>
    %cst_56 = arith.constant dense<0.000000e+00> : vector<128x128xf32>
    %163 = tpu.matmul %3, %162, %cst_56 {dimension_numbers = #tpu.dot_dimension_numbers<[1], [0], [0], [1], [0, 0, 1, 1], [], []>} : vector<128x32xbf16>, vector<32x128xbf16>, vector<128x128xf32> -> vector<128x128xf32>
    %164 = arith.addf %161, %163 : vector<128x128xf32>
    %165 = vector.extract_strided_slice %164 {offsets = [0, 0], sizes = [32, 128], strides = [1, 1]} : vector<128x128xf32> to vector<32x128xf32>
    %cst_57 = arith.constant 5.000000e-01 : f32
    %166 = vector.broadcast %cst_57 : f32 to vector<32x128xf32>
    %167 = arith.mulf %166, %165 : vector<32x128xf32>
    %168 = math.tanh %167 : vector<32x128xf32>
    %cst_58 = arith.constant 5.000000e-01 : f32
    %169 = vector.broadcast %cst_58 : f32 to vector<32x128xf32>
    %170 = arith.mulf %169, %168 : vector<32x128xf32>
    %cst_59 = arith.constant 5.000000e-01 : f32
    %171 = vector.broadcast %cst_59 : f32 to vector<32x128xf32>
    %172 = arith.addf %170, %171 : vector<32x128xf32>
    %173 = vector.extract_strided_slice %164 {offsets = [32, 0], sizes = [32, 128], strides = [1, 1]} : vector<128x128xf32> to vector<32x128xf32>
    %cst_60 = arith.constant 5.000000e-01 : f32
    %174 = vector.broadcast %cst_60 : f32 to vector<32x128xf32>
    %175 = arith.mulf %174, %173 : vector<32x128xf32>
    %176 = math.tanh %175 : vector<32x128xf32>
    %cst_61 = arith.constant 5.000000e-01 : f32
    %177 = vector.broadcast %cst_61 : f32 to vector<32x128xf32>
    %178 = arith.mulf %177, %176 : vector<32x128xf32>
    %cst_62 = arith.constant 5.000000e-01 : f32
    %179 = vector.broadcast %cst_62 : f32 to vector<32x128xf32>
    %180 = arith.addf %178, %179 : vector<32x128xf32>
    %181 = vector.extract_strided_slice %164 {offsets = [64, 0], sizes = [32, 128], strides = [1, 1]} : vector<128x128xf32> to vector<32x128xf32>
    %182 = math.tanh %181 : vector<32x128xf32>
    %183 = vector.extract_strided_slice %164 {offsets = [96, 0], sizes = [32, 128], strides = [1, 1]} : vector<128x128xf32> to vector<32x128xf32>
    %cst_63 = arith.constant 5.000000e-01 : f32
    %184 = vector.broadcast %cst_63 : f32 to vector<32x128xf32>
    %185 = arith.mulf %184, %183 : vector<32x128xf32>
    %186 = math.tanh %185 : vector<32x128xf32>
    %cst_64 = arith.constant 5.000000e-01 : f32
    %187 = vector.broadcast %cst_64 : f32 to vector<32x128xf32>
    %188 = arith.mulf %187, %186 : vector<32x128xf32>
    %cst_65 = arith.constant 5.000000e-01 : f32
    %189 = vector.broadcast %cst_65 : f32 to vector<32x128xf32>
    %190 = arith.addf %188, %189 : vector<32x128xf32>
    %191 = arith.mulf %180, %155 : vector<32x128xf32>
    %192 = arith.mulf %172, %182 : vector<32x128xf32>
    %193 = arith.addf %191, %192 : vector<32x128xf32>
    %194 = math.tanh %193 : vector<32x128xf32>
    %195 = arith.mulf %190, %194 : vector<32x128xf32>
    %c5_i32 = arith.constant 5 : i32
    %196 = arith.index_cast %c5_i32 : i32 to index
    %c0_66 = arith.constant 0 : index
    %c0_67 = arith.constant 0 : index
    %197 = vector.load %arg2[%196, %c0_66, %c0_67] : memref<8x128x128xbf16, #tpu.memory_space<vmem>>, vector<1x128x128xbf16>
    %198 = vector.shape_cast %197 : vector<1x128x128xbf16> to vector<128x128xbf16>
    %199 = arith.extf %198 : vector<128x128xbf16> to vector<128x128xf32>
    %200 = arith.truncf %195 : vector<32x128xf32> to vector<32x128xbf16>
    %cst_68 = arith.constant dense<0.000000e+00> : vector<128x128xf32>
    %201 = tpu.matmul %3, %200, %cst_68 {dimension_numbers = #tpu.dot_dimension_numbers<[1], [0], [0], [1], [0, 0, 1, 1], [], []>} : vector<128x32xbf16>, vector<32x128xbf16>, vector<128x128xf32> -> vector<128x128xf32>
    %202 = arith.addf %199, %201 : vector<128x128xf32>
    %203 = vector.extract_strided_slice %202 {offsets = [0, 0], sizes = [32, 128], strides = [1, 1]} : vector<128x128xf32> to vector<32x128xf32>
    %cst_69 = arith.constant 5.000000e-01 : f32
    %204 = vector.broadcast %cst_69 : f32 to vector<32x128xf32>
    %205 = arith.mulf %204, %203 : vector<32x128xf32>
    %206 = math.tanh %205 : vector<32x128xf32>
    %cst_70 = arith.constant 5.000000e-01 : f32
    %207 = vector.broadcast %cst_70 : f32 to vector<32x128xf32>
    %208 = arith.mulf %207, %206 : vector<32x128xf32>
    %cst_71 = arith.constant 5.000000e-01 : f32
    %209 = vector.broadcast %cst_71 : f32 to vector<32x128xf32>
    %210 = arith.addf %208, %209 : vector<32x128xf32>
    %211 = vector.extract_strided_slice %202 {offsets = [32, 0], sizes = [32, 128], strides = [1, 1]} : vector<128x128xf32> to vector<32x128xf32>
    %cst_72 = arith.constant 5.000000e-01 : f32
    %212 = vector.broadcast %cst_72 : f32 to vector<32x128xf32>
    %213 = arith.mulf %212, %211 : vector<32x128xf32>
    %214 = math.tanh %213 : vector<32x128xf32>
    %cst_73 = arith.constant 5.000000e-01 : f32
    %215 = vector.broadcast %cst_73 : f32 to vector<32x128xf32>
    %216 = arith.mulf %215, %214 : vector<32x128xf32>
    %cst_74 = arith.constant 5.000000e-01 : f32
    %217 = vector.broadcast %cst_74 : f32 to vector<32x128xf32>
    %218 = arith.addf %216, %217 : vector<32x128xf32>
    %219 = vector.extract_strided_slice %202 {offsets = [64, 0], sizes = [32, 128], strides = [1, 1]} : vector<128x128xf32> to vector<32x128xf32>
    %220 = math.tanh %219 : vector<32x128xf32>
    %221 = vector.extract_strided_slice %202 {offsets = [96, 0], sizes = [32, 128], strides = [1, 1]} : vector<128x128xf32> to vector<32x128xf32>
    %cst_75 = arith.constant 5.000000e-01 : f32
    %222 = vector.broadcast %cst_75 : f32 to vector<32x128xf32>
    %223 = arith.mulf %222, %221 : vector<32x128xf32>
    %224 = math.tanh %223 : vector<32x128xf32>
    %cst_76 = arith.constant 5.000000e-01 : f32
    %225 = vector.broadcast %cst_76 : f32 to vector<32x128xf32>
    %226 = arith.mulf %225, %224 : vector<32x128xf32>
    %cst_77 = arith.constant 5.000000e-01 : f32
    %227 = vector.broadcast %cst_77 : f32 to vector<32x128xf32>
    %228 = arith.addf %226, %227 : vector<32x128xf32>
    %229 = arith.mulf %218, %193 : vector<32x128xf32>
    %230 = arith.mulf %210, %220 : vector<32x128xf32>
    %231 = arith.addf %229, %230 : vector<32x128xf32>
    %232 = math.tanh %231 : vector<32x128xf32>
    %233 = arith.mulf %228, %232 : vector<32x128xf32>
    %c6_i32 = arith.constant 6 : i32
    %234 = arith.index_cast %c6_i32 : i32 to index
    %c0_78 = arith.constant 0 : index
    %c0_79 = arith.constant 0 : index
    %235 = vector.load %arg2[%234, %c0_78, %c0_79] : memref<8x128x128xbf16, #tpu.memory_space<vmem>>, vector<1x128x128xbf16>
    %236 = vector.shape_cast %235 : vector<1x128x128xbf16> to vector<128x128xbf16>
    %237 = arith.extf %236 : vector<128x128xbf16> to vector<128x128xf32>
    %238 = arith.truncf %233 : vector<32x128xf32> to vector<32x128xbf16>
    %cst_80 = arith.constant dense<0.000000e+00> : vector<128x128xf32>
    %239 = tpu.matmul %3, %238, %cst_80 {dimension_numbers = #tpu.dot_dimension_numbers<[1], [0], [0], [1], [0, 0, 1, 1], [], []>} : vector<128x32xbf16>, vector<32x128xbf16>, vector<128x128xf32> -> vector<128x128xf32>
    %240 = arith.addf %237, %239 : vector<128x128xf32>
    %241 = vector.extract_strided_slice %240 {offsets = [0, 0], sizes = [32, 128], strides = [1, 1]} : vector<128x128xf32> to vector<32x128xf32>
    %cst_81 = arith.constant 5.000000e-01 : f32
    %242 = vector.broadcast %cst_81 : f32 to vector<32x128xf32>
    %243 = arith.mulf %242, %241 : vector<32x128xf32>
    %244 = math.tanh %243 : vector<32x128xf32>
    %cst_82 = arith.constant 5.000000e-01 : f32
    %245 = vector.broadcast %cst_82 : f32 to vector<32x128xf32>
    %246 = arith.mulf %245, %244 : vector<32x128xf32>
    %cst_83 = arith.constant 5.000000e-01 : f32
    %247 = vector.broadcast %cst_83 : f32 to vector<32x128xf32>
    %248 = arith.addf %246, %247 : vector<32x128xf32>
    %249 = vector.extract_strided_slice %240 {offsets = [32, 0], sizes = [32, 128], strides = [1, 1]} : vector<128x128xf32> to vector<32x128xf32>
    %cst_84 = arith.constant 5.000000e-01 : f32
    %250 = vector.broadcast %cst_84 : f32 to vector<32x128xf32>
    %251 = arith.mulf %250, %249 : vector<32x128xf32>
    %252 = math.tanh %251 : vector<32x128xf32>
    %cst_85 = arith.constant 5.000000e-01 : f32
    %253 = vector.broadcast %cst_85 : f32 to vector<32x128xf32>
    %254 = arith.mulf %253, %252 : vector<32x128xf32>
    %cst_86 = arith.constant 5.000000e-01 : f32
    %255 = vector.broadcast %cst_86 : f32 to vector<32x128xf32>
    %256 = arith.addf %254, %255 : vector<32x128xf32>
    %257 = vector.extract_strided_slice %240 {offsets = [64, 0], sizes = [32, 128], strides = [1, 1]} : vector<128x128xf32> to vector<32x128xf32>
    %258 = math.tanh %257 : vector<32x128xf32>
    %259 = vector.extract_strided_slice %240 {offsets = [96, 0], sizes = [32, 128], strides = [1, 1]} : vector<128x128xf32> to vector<32x128xf32>
    %cst_87 = arith.constant 5.000000e-01 : f32
    %260 = vector.broadcast %cst_87 : f32 to vector<32x128xf32>
    %261 = arith.mulf %260, %259 : vector<32x128xf32>
    %262 = math.tanh %261 : vector<32x128xf32>
    %cst_88 = arith.constant 5.000000e-01 : f32
    %263 = vector.broadcast %cst_88 : f32 to vector<32x128xf32>
    %264 = arith.mulf %263, %262 : vector<32x128xf32>
    %cst_89 = arith.constant 5.000000e-01 : f32
    %265 = vector.broadcast %cst_89 : f32 to vector<32x128xf32>
    %266 = arith.addf %264, %265 : vector<32x128xf32>
    %267 = arith.mulf %256, %231 : vector<32x128xf32>
    %268 = arith.mulf %248, %258 : vector<32x128xf32>
    %269 = arith.addf %267, %268 : vector<32x128xf32>
    %270 = math.tanh %269 : vector<32x128xf32>
    %271 = arith.mulf %266, %270 : vector<32x128xf32>
    %c7_i32 = arith.constant 7 : i32
    %272 = arith.index_cast %c7_i32 : i32 to index
    %c0_90 = arith.constant 0 : index
    %c0_91 = arith.constant 0 : index
    %273 = vector.load %arg2[%272, %c0_90, %c0_91] : memref<8x128x128xbf16, #tpu.memory_space<vmem>>, vector<1x128x128xbf16>
    %274 = vector.shape_cast %273 : vector<1x128x128xbf16> to vector<128x128xbf16>
    %275 = arith.extf %274 : vector<128x128xbf16> to vector<128x128xf32>
    %276 = arith.truncf %271 : vector<32x128xf32> to vector<32x128xbf16>
    %cst_92 = arith.constant dense<0.000000e+00> : vector<128x128xf32>
    %277 = tpu.matmul %3, %276, %cst_92 {dimension_numbers = #tpu.dot_dimension_numbers<[1], [0], [0], [1], [0, 0, 1, 1], [], []>} : vector<128x32xbf16>, vector<32x128xbf16>, vector<128x128xf32> -> vector<128x128xf32>
    %278 = arith.addf %275, %277 : vector<128x128xf32>
    %279 = vector.extract_strided_slice %278 {offsets = [0, 0], sizes = [32, 128], strides = [1, 1]} : vector<128x128xf32> to vector<32x128xf32>
    %cst_93 = arith.constant 5.000000e-01 : f32
    %280 = vector.broadcast %cst_93 : f32 to vector<32x128xf32>
    %281 = arith.mulf %280, %279 : vector<32x128xf32>
    %282 = math.tanh %281 : vector<32x128xf32>
    %cst_94 = arith.constant 5.000000e-01 : f32
    %283 = vector.broadcast %cst_94 : f32 to vector<32x128xf32>
    %284 = arith.mulf %283, %282 : vector<32x128xf32>
    %cst_95 = arith.constant 5.000000e-01 : f32
    %285 = vector.broadcast %cst_95 : f32 to vector<32x128xf32>
    %286 = arith.addf %284, %285 : vector<32x128xf32>
    %287 = vector.extract_strided_slice %278 {offsets = [32, 0], sizes = [32, 128], strides = [1, 1]} : vector<128x128xf32> to vector<32x128xf32>
    %cst_96 = arith.constant 5.000000e-01 : f32
    %288 = vector.broadcast %cst_96 : f32 to vector<32x128xf32>
    %289 = arith.mulf %288, %287 : vector<32x128xf32>
    %290 = math.tanh %289 : vector<32x128xf32>
    %cst_97 = arith.constant 5.000000e-01 : f32
    %291 = vector.broadcast %cst_97 : f32 to vector<32x128xf32>
    %292 = arith.mulf %291, %290 : vector<32x128xf32>
    %cst_98 = arith.constant 5.000000e-01 : f32
    %293 = vector.broadcast %cst_98 : f32 to vector<32x128xf32>
    %294 = arith.addf %292, %293 : vector<32x128xf32>
    %295 = vector.extract_strided_slice %278 {offsets = [64, 0], sizes = [32, 128], strides = [1, 1]} : vector<128x128xf32> to vector<32x128xf32>
    %296 = math.tanh %295 : vector<32x128xf32>
    %297 = vector.extract_strided_slice %278 {offsets = [96, 0], sizes = [32, 128], strides = [1, 1]} : vector<128x128xf32> to vector<32x128xf32>
    %cst_99 = arith.constant 5.000000e-01 : f32
    %298 = vector.broadcast %cst_99 : f32 to vector<32x128xf32>
    %299 = arith.mulf %298, %297 : vector<32x128xf32>
    %300 = math.tanh %299 : vector<32x128xf32>
    %cst_100 = arith.constant 5.000000e-01 : f32
    %301 = vector.broadcast %cst_100 : f32 to vector<32x128xf32>
    %302 = arith.mulf %301, %300 : vector<32x128xf32>
    %cst_101 = arith.constant 5.000000e-01 : f32
    %303 = vector.broadcast %cst_101 : f32 to vector<32x128xf32>
    %304 = arith.addf %302, %303 : vector<32x128xf32>
    %305 = arith.mulf %294, %269 : vector<32x128xf32>
    %306 = arith.mulf %286, %296 : vector<32x128xf32>
    %307 = arith.addf %305, %306 : vector<32x128xf32>
    %308 = math.tanh %307 : vector<32x128xf32>
    %309 = arith.mulf %304, %308 : vector<32x128xf32>
    %c8_i32 = arith.constant 8 : i32
    %c0_102 = arith.constant 0 : index
    %c0_103 = arith.constant 0 : index
    %310 = vector.load %arg7[%c0_102, %c0_103] : memref<32x128xf32, #tpu.memory_space<vmem>>, vector<32x128xf32>
    tpu.vector_store %arg7[%c0_102, %c0_103], %309 {strides = array<i32>} : memref<32x128xf32, #tpu.memory_space<vmem>>, vector<32x128xf32>,
    %c0_104 = arith.constant 0 : index
    %c0_105 = arith.constant 0 : index
    %311 = vector.load %arg8[%c0_104, %c0_105] : memref<32x128xf32, #tpu.memory_space<vmem>>, vector<32x128xf32>
    tpu.vector_store %arg8[%c0_104, %c0_105], %307 {strides = array<i32>} : memref<32x128xf32, #tpu.memory_space<vmem>>, vector<32x128xf32>,
    %c0_i32_106 = arith.constant 0 : i32
    %312 = arith.cmpi eq, %arg1, %c0_i32_106 : i32
    %313 = arith.extui %312 : i1 to i32
    %c0_i32_107 = arith.constant 0 : i32
    %314 = arith.cmpi ne, %313, %c0_i32_107 : i32
    scf.if %314 {
      %c0_108 = arith.constant 0 : index
      %c0_109 = arith.constant 0 : index
      %315 = vector.load %arg4[%c0_108, %c0_109] : memref<16x32xbf16, #tpu.memory_space<vmem>>, vector<16x32xbf16>
      %316 = arith.truncf %309 : vector<32x128xf32> to vector<32x128xbf16>
      %cst_110 = arith.constant dense<0.000000e+00> : vector<16x128xf32>
      %317 = tpu.matmul %315, %316, %cst_110 {dimension_numbers = #tpu.dot_dimension_numbers<[1], [0], [0], [1], [0, 0, 1, 1], [], []>} : vector<16x32xbf16>, vector<32x128xbf16>, vector<16x128xf32> -> vector<16x128xf32>
      %c0_111 = arith.constant 0 : index
      %c0_112 = arith.constant 0 : index
      %318 = vector.load %arg5[%c0_111, %c0_112] : memref<16x1xf32, #tpu.memory_space<vmem>>, vector<16x1xf32>
      %319 = vector.broadcast %318 : vector<16x1xf32> to vector<16x128xf32>
      %320 = arith.addf %317, %319 : vector<16x128xf32>
      %321 = arith.truncf %320 : vector<16x128xf32> to vector<16x128xbf16>
      %c0_113 = arith.constant 0 : index
      %c0_114 = arith.constant 0 : index
      %322 = vector.load %arg6[%c0_113, %c0_114] : memref<16x128xbf16, #tpu.memory_space<vmem>>, vector<16x128xbf16>
      tpu.vector_store %arg6[%c0_113, %c0_114], %321 {strides = array<i32>} : memref<16x128xbf16, #tpu.memory_space<vmem>>, vector<16x128xbf16>,
    } else {
    }
    return
  }
  func.func @transform_0(%arg0: i32, %arg1: i32) -> (i32, i32, i32) {
    %c0_i32 = arith.constant 0 : i32
    %c0_i32_0 = arith.constant 0 : i32
    return %arg1, %c0_i32, %arg0 : i32, i32, i32
  }
  func.func @transform_1(%arg0: i32, %arg1: i32) -> (i32, i32) {
    %c0_i32 = arith.constant 0 : i32
    %c0_i32_0 = arith.constant 0 : i32
    %c0_i32_1 = arith.constant 0 : i32
    return %c0_i32, %c0_i32_0 : i32, i32
  }
  func.func @transform_2(%arg0: i32, %arg1: i32) -> (i32, i32) {
    %c0_i32 = arith.constant 0 : i32
    %c0_i32_0 = arith.constant 0 : i32
    %c0_i32_1 = arith.constant 0 : i32
    return %c0_i32, %c0_i32_0 : i32, i32
  }
  func.func @transform_3(%arg0: i32, %arg1: i32) -> (i32, i32) {
    %c0_i32 = arith.constant 0 : i32
    %c0_i32_0 = arith.constant 0 : i32
    %c0_i32_1 = arith.constant 0 : i32
    return %c0_i32, %c0_i32_0 : i32, i32
  }
  func.func @transform_4(%arg0: i32, %arg1: i32) -> (i32, i32) {
    %c0_i32 = arith.constant 0 : i32
    %c0_i32_0 = arith.constant 0 : i32
    return %c0_i32, %arg0 : i32, i32
  }
}

</mosaic_0001>

<llo_original>
// kernel: lstm_classifier_forward.1
$region0: #{lstm_classifier_forward.1}
  #allocation0 [shape = 'u32[]', space=smem, size = 0x4, offset = 0x4, fixed_abs, tag = 'smem constant byte address 0x4 - core index']
  #allocation1 [shape = 'u32[72,128]{1,0:T(1,128)}', space=vmem, size = 0x9000, scoped, tag = 'internal scratch']
  #allocation2 [shape = 'f32[32,128]{1,0:T(8,128)}', space=vmem, size = 0x4000, scoped, tag = 'scratch operand']
  #allocation3 [shape = 'f32[32,128]{1,0:T(8,128)}', space=vmem, size = 0x4000, scoped, tag = 'scratch operand']
  %s0 = inlined_call_operand.vmem [shape: bf16[8,128,128], index: 0, kind: input, shape index: {}]
  %s1 = inlined_call_operand.vmem [shape: bf16[128,32], index: 1, kind: input, shape index: {}]
  %s2 = inlined_call_operand.vmem [shape: bf16[16,32], index: 2, kind: input, shape index: {}]
  %s3 = inlined_call_operand.vmem [shape: f32[16,1], index: 3, kind: input, shape index: {}]
  %s4 = inlined_call_operand.vmem [shape: bf16[16,128], index: 4, kind: output, shape index: {}]
  %s5 = sld [smem:[#allocation0]]
  $region34: #{lstm_classifier_forward.1} parent=0
    _
  %s7 = ssub.s32 1, %s5
  %s8 = scalar_select 0, %s7, %s5
  // Predicated region
  $region2: #{lstm_classifier_forward.1} parent=0 // pred_check
    _
  $region3: #{lstm_classifier_forward.1} parent=0 // pred_check_branch
    %10 = sbr.rel (0) target = $region5
  $region4: #{lstm_classifier_forward.1} parent=0 // pred_region
    _
  $region5: #{lstm_classifier_forward.1} parent=0 // pred_fallthru
    _
  // Predicated region
  $region6: #{lstm_classifier_forward.1} parent=0 // pred_check
    _
  $region7: #{lstm_classifier_forward.1} parent=0 // pred_check_branch
    %12 = sbr.rel (0) target = $region9
  $region8: #{lstm_classifier_forward.1} parent=0 // pred_region
    _
  $region9: #{lstm_classifier_forward.1} parent=0 // pred_fallthru
    _
  // Predicated region
  $region10: #{lstm_classifier_forward.1} parent=0 // pred_check
    _
  $region11: #{lstm_classifier_forward.1} parent=0 // pred_check_branch
    %14 = sbr.rel (0) target = $region13
  $region12: #{lstm_classifier_forward.1} parent=0 // pred_region
    _
  $region13: #{lstm_classifier_forward.1} parent=0 // pred_fallthru
    _
  // Predicated region
  $region14: #{lstm_classifier_forward.1} parent=0 // pred_check
    _
  $region15: #{lstm_classifier_forward.1} parent=0 // pred_check_branch
    %16 = sbr.rel (0) target = $region17
  $region16: #{lstm_classifier_forward.1} parent=0 // pred_region
    _
  $region17: #{lstm_classifier_forward.1} parent=0 // pred_fallthru
    _
  %p18 = scmp.eq.s32.totalorder 0, 0
  // Predicated region
  $region18: #{lstm_classifier_forward.1} parent=0 // pred_check
    %p19 = pneg %p18
  $region19: #{lstm_classifier_forward.1} parent=0 // pred_check_branch
    %21 = sbr.rel (%p19) target = $region21
  $region20: #{lstm_classifier_forward.1} parent=0 // pred_region
    %22 = vst [vmem:[#allocation2] sm:$0xff] 0.0
    %23 = vst [vmem:[#allocation2 + $0x8] sm:$0xff] 0.0
    %24 = vst [vmem:[#allocation2 + $0x10] sm:$0xff] 0.0
    %25 = vst [vmem:[#allocation2 + $0x18] sm:$0xff] 0.0
    %26 = vst [vmem:[#allocation3] sm:$0xff] 0.0
    %27 = vst [vmem:[#allocation3 + $0x8] sm:$0xff] 0.0
    %28 = vst [vmem:[#allocation3 + $0x10] sm:$0xff] 0.0
    %29 = vst [vmem:[#allocation3 + $0x18] sm:$0xff] 0.0
  $region21: #{lstm_classifier_forward.1} parent=0 // pred_fallthru
    _
  %v30 = vld [vmem:[%s1] sm:$0xf]
  %v31 = vld [vmem:[%s1 + $0x4] sm:$0xf]
  %v32 = vld [vmem:[%s1 + $0x8] sm:$0xf]
  %v33 = vld [vmem:[%s1 + $0xc] sm:$0xf]
  %v34 = vld [vmem:[%s1 + $0x10] sm:$0xf]
  %v35 = vld [vmem:[%s1 + $0x14] sm:$0xf]
  %v36 = vld [vmem:[%s1 + $0x18] sm:$0xf]
  %v37 = vld [vmem:[%s1 + $0x1c] sm:$0xf]
  %v38 = vld [vmem:[%s1 + $0x20] sm:$0xf]
  %v39 = vld [vmem:[%s1 + $0x24] sm:$0xf]
  %v40 = vld [vmem:[%s1 + $0x28] sm:$0xf]
  %v41 = vld [vmem:[%s1 + $0x2c] sm:$0xf]
  %v42 = vld [vmem:[%s1 + $0x30] sm:$0xf]
  %v43 = vld [vmem:[%s1 + $0x34] sm:$0xf]
  %v44 = vld [vmem:[%s1 + $0x38] sm:$0xf]
  %v45 = vld [vmem:[%s1 + $0x3c] sm:$0xf]
  %v46 = vld [vmem:[#allocation2] sm:$0xff]
  %v47 = vld [vmem:[#allocation2 + $0x8] sm:$0xff]
  %v48 = vld [vmem:[#allocation2 + $0x10] sm:$0xff]
  %v49 = vld [vmem:[#allocation2 + $0x18] sm:$0xff]
  %v50 = vld [vmem:[#allocation3] sm:$0xff]
  %v51 = vld [vmem:[#allocation3 + $0x8] sm:$0xff]
  %v52 = vld [vmem:[#allocation3 + $0x10] sm:$0xff]
  %v53 = vld [vmem:[#allocation3 + $0x18] sm:$0xff]
  %v54 = vld [vmem:[%s0] sm:$0xf]
  %v55 = vld [vmem:[%s0 + $0x4] sm:$0xf]
  %v56 = vld [vmem:[%s0 + $0x8] sm:$0xf]
  %v57 = vld [vmem:[%s0 + $0xc] sm:$0xf]
  %v58 = vld [vmem:[%s0 + $0x10] sm:$0xf]
  %v59 = vld [vmem:[%s0 + $0x14] sm:$0xf]
  %v60 = vld [vmem:[%s0 + $0x18] sm:$0xf]
  %v61 = vld [vmem:[%s0 + $0x1c] sm:$0xf]
  %v62 = vld [vmem:[%s0 + $0x20] sm:$0xf]
  %v63 = vld [vmem:[%s0 + $0x24] sm:$0xf]
  %v64 = vld [vmem:[%s0 + $0x28] sm:$0xf]
  %v65 = vld [vmem:[%s0 + $0x2c] sm:$0xf]
  %v66 = vld [vmem:[%s0 + $0x30] sm:$0xf]
  %v67 = vld [vmem:[%s0 + $0x34] sm:$0xf]
  %v68 = vld [vmem:[%s0 + $0x38] sm:$0xf]
  %v69 = vld [vmem:[%s0 + $0x3c] sm:$0xf]
  %v70 = vunpack.c.l.bf16 %v54
  %v71 = vunpack.c.l.bf16 %v55
  %v72 = vunpack.c.l.bf16 %v56
  %v73 = vunpack.c.l.bf16 %v57
  %v74 = vunpack.c.l.bf16 %v58
  %v75 = vunpack.c.l.bf16 %v59
  %v76 = vunpack.c.l.bf16 %v60
  %v77 = vunpack.c.l.bf16 %v61
  %v78 = vunpack.c.l.bf16 %v62
  %v79 = vunpack.c.l.bf16 %v63
  %v80 = vunpack.c.l.bf16 %v64
  %v81 = vunpack.c.l.bf16 %v65
  %v82 = vunpack.c.l.bf16 %v66
  %v83 = vunpack.c.l.bf16 %v67
  %v84 = vunpack.c.l.bf16 %v68
  %v85 = vunpack.c.l.bf16 %v69
  %v86 = vpack.c.bf16 %v47, %v46
  %v87 = vpack.c.bf16 %v49, %v48
  %v104 = vunpack.c.l.b16 %v30
  %v105 = vunpack.c.l.b16 %v31
  %v106 = vunpack.c.l.b16 %v32
  %v107 = vunpack.c.l.b16 %v33
  %v108 = vunpack.c.l.b16 %v34
  %v109 = vunpack.c.l.b16 %v35
  %v110 = vunpack.c.l.b16 %v36
  %v111 = vunpack.c.l.b16 %v37
  %v112 = vunpack.c.l.b16 %v38
  %v113 = vunpack.c.l.b16 %v39
  %v114 = vunpack.c.l.b16 %v40
  %v115 = vunpack.c.l.b16 %v41
  %v116 = vunpack.c.l.b16 %v42
  %v117 = vunpack.c.l.b16 %v43
  %v118 = vunpack.c.l.b16 %v44
  %v119 = vunpack.c.l.b16 %v45
  %v120 = vpack.c.b16 %v105, %v104
  %v121 = vpack.c.b16 %v107, %v106
  %v122 = vpack.c.b16 %v109, %v108
  %v123 = vpack.c.b16 %v111, %v110
  %v124 = vpack.c.b16 %v113, %v112
  %v125 = vpack.c.b16 %v115, %v114
  %v126 = vpack.c.b16 %v117, %v116
  %v127 = vpack.c.b16 %v119, %v118
  %vm128 = vcmask 261120
  %v130 = vsel %vm128, %v120, 0
  %v133 = vsel %vm128, %v121, 0
  %v136 = vsel %vm128, %v122, 0
  %v139 = vsel %vm128, %v123, 0
  %v142 = vsel %vm128, %v124, 0
  %v145 = vsel %vm128, %v125, 0
  %v148 = vsel %vm128, %v126, 0
  %v151 = vsel %vm128, %v127, 0
  %153 = vmatpush.bf16.msra.mxu0 0
  %154 = vmatpush.bf16.msra.mxu0 0
  %155 = vmatpush.bf16.msra.mxu0 0
  %156 = vmatpush.bf16.msra.mxu0 0
  %157 = vmatpush.bf16.msra.mxu0 0
  %158 = vmatpush.bf16.msra.mxu0 0
  %159 = vmatpush.bf16.msra.mxu0 %v87
  %160 = vmatpush.bf16.msra.mxu0 %v86
  %161 = vmatmul.bf16.gmra.mxu0 %v130
  %v162 = vpop.f32.mrf.mxu0
  %v163 = vadd.f32 0.0, %v162
  %v164 = vpop.f32.mrf.mxu0
  %v165 = vadd.f32 0.0, %v164
  %166 = vmatmul.bf16.gmra.mxu0 %v133
  %v167 = vpop.f32.mrf.mxu0
  %v168 = vadd.f32 0.0, %v167
  %v169 = vpop.f32.mrf.mxu0
  %v170 = vadd.f32 0.0, %v169
  %171 = vmatmul.bf16.gmra.mxu0 %v136
  %v172 = vpop.f32.mrf.mxu0
  %v173 = vadd.f32 0.0, %v172
  %v174 = vpop.f32.mrf.mxu0
  %v175 = vadd.f32 0.0, %v174
  %176 = vmatmul.bf16.gmra.mxu0 %v139
  %v177 = vpop.f32.mrf.mxu0
  %v178 = vadd.f32 0.0, %v177
  %v179 = vpop.f32.mrf.mxu0
  %v180 = vadd.f32 0.0, %v179
  %181 = vmatmul.bf16.gmra.mxu0 %v142
  %v182 = vpop.f32.mrf.mxu0
  %v183 = vadd.f32 0.0, %v182
  %v184 = vpop.f32.mrf.mxu0
  %v185 = vadd.f32 0.0, %v184
  %186 = vmatmul.bf16.gmra.mxu0 %v145
  %v187 = vpop.f32.mrf.mxu0
  %v188 = vadd.f32 0.0, %v187
  %v189 = vpop.f32.mrf.mxu0
  %v190 = vadd.f32 0.0, %v189
  %191 = vmatmul.bf16.gmra.mxu0 %v148
  %v192 = vpop.f32.mrf.mxu0
  %v193 = vadd.f32 0.0, %v192
  %v194 = vpop.f32.mrf.mxu0
  %v195 = vadd.f32 0.0, %v194
  %196 = vmatmul.bf16.gmra.mxu0 %v151
  %v197 = vpop.f32.mrf.mxu0
  %v198 = vadd.f32 0.0, %v197
  %v199 = vpop.f32.mrf.mxu0
  %v200 = vadd.f32 0.0, %v199
  %201 = vdwg.mxu0
  %v202 = vadd.f32 %v70, %v163
  %v203 = vadd.f32 %v71, %v165
  %v204 = vadd.f32 %v72, %v168
  %v205 = vadd.f32 %v73, %v170
  %v206 = vadd.f32 %v74, %v173
  %v207 = vadd.f32 %v75, %v175
  %v208 = vadd.f32 %v76, %v178
  %v209 = vadd.f32 %v77, %v180
  %v210 = vadd.f32 %v78, %v183
  %v211 = vadd.f32 %v79, %v185
  %v212 = vadd.f32 %v80, %v188
  %v213 = vadd.f32 %v81, %v190
  %v214 = vadd.f32 %v82, %v193
  %v215 = vadd.f32 %v83, %v195
  %v216 = vadd.f32 %v84, %v198
  %v217 = vadd.f32 %v85, %v200
  %v218 = vmul.f32 %v202, 0.5
  %v219 = vmul.f32 %v203, 0.5
  %v220 = vmul.f32 %v204, 0.5
  %v221 = vmul.f32 %v205, 0.5
  %v222 = vtanh.pop %v218
  %v223 = vtanh.pop %v219
  %v224 = vtanh.pop %v220
  %v225 = vtanh.pop %v221
  %v226 = vmul.f32 %v222, 0.5
  %v227 = vmul.f32 %v223, 0.5
  %v228 = vmul.f32 %v224, 0.5
  %v229 = vmul.f32 %v225, 0.5
  %v230 = vadd.f32 %v226, 0.5
  %v231 = vadd.f32 %v227, 0.5
  %v232 = vadd.f32 %v228, 0.5
  %v233 = vadd.f32 %v229, 0.5
  %v234 = vmul.f32 %v206, 0.5
  %v235 = vmul.f32 %v207, 0.5
  %v236 = vmul.f32 %v208, 0.5
  %v237 = vmul.f32 %v209, 0.5
  %v238 = vtanh.pop %v234
  %v239 = vtanh.pop %v235
  %v240 = vtanh.pop %v236
  %v241 = vtanh.pop %v237
  %v242 = vmul.f32 %v238, 0.5
  %v243 = vmul.f32 %v239, 0.5
  %v244 = vmul.f32 %v240, 0.5
  %v245 = vmul.f32 %v241, 0.5
  %v246 = vadd.f32 %v242, 0.5
  %v247 = vadd.f32 %v243, 0.5
  %v248 = vadd.f32 %v244, 0.5
  %v249 = vadd.f32 %v245, 0.5
  %v250 = vtanh.pop %v210
  %v251 = vtanh.pop %v211
  %v252 = vtanh.pop %v212
  %v253 = vtanh.pop %v213
  %v254 = vmul.f32 %v214, 0.5
  %v255 = vmul.f32 %v215, 0.5
  %v256 = vmul.f32 %v216, 0.5
  %v257 = vmul.f32 %v217, 0.5
  %v258 = vtanh.pop %v254
  %v259 = vtanh.pop %v255
  %v260 = vtanh.pop %v256
  %v261 = vtanh.pop %v257
  %v262 = vmul.f32 %v258, 0.5
  %v263 = vmul.f32 %v259, 0.5
  %v264 = vmul.f32 %v260, 0.5
  %v265 = vmul.f32 %v261, 0.5
  %v266 = vadd.f32 %v262, 0.5
  %v267 = vadd.f32 %v263, 0.5
  %v268 = vadd.f32 %v264, 0.5
  %v269 = vadd.f32 %v265, 0.5
  %v270 = vmul.f32 %v246, %v50
  %v271 = vmul.f32 %v247, %v51
  %v272 = vmul.f32 %v248, %v52
  %v273 = vmul.f32 %v249, %v53
  %v274 = vmul.f32 %v230, %v250
  %v275 = vmul.f32 %v231, %v251
  %v276 = vmul.f32 %v232, %v252
  %v277 = vmul.f32 %v233, %v253
  %v278 = vadd.f32 %v270, %v274
  %v279 = vadd.f32 %v271, %v275
  %v280 = vadd.f32 %v272, %v276
  %v281 = vadd.f32 %v273, %v277
  %v282 = vtanh.pop %v278
  %v283 = vtanh.pop %v279
  %v284 = vtanh.pop %v280
  %v285 = vtanh.pop %v281
  %v286 = vmul.f32 %v266, %v282
  %v287 = vmul.f32 %v267, %v283
  %v288 = vmul.f32 %v268, %v284
  %v289 = vmul.f32 %v269, %v285
  %s290 = scalar_lea.vmem %s0, 64
  %v291 = vld [vmem:[%s290] sm:$0xf]
  %v292 = vld [vmem:[%s290 + $0x4] sm:$0xf]
  %v293 = vld [vmem:[%s290 + $0x8] sm:$0xf]
  %v294 = vld [vmem:[%s290 + $0xc] sm:$0xf]
  %v295 = vld [vmem:[%s290 + $0x10] sm:$0xf]
  %v296 = vld [vmem:[%s290 + $0x14] sm:$0xf]
  %v297 = vld [vmem:[%s290 + $0x18] sm:$0xf]
  %v298 = vld [vmem:[%s290 + $0x1c] sm:$0xf]
  %v299 = vld [vmem:[%s290 + $0x20] sm:$0xf]
  %v300 = vld [vmem:[%s290 + $0x24] sm:$0xf]
  %v301 = vld [vmem:[%s290 + $0x28] sm:$0xf]
  %v302 = vld [vmem:[%s290 + $0x2c] sm:$0xf]
  %v303 = vld [vmem:[%s290 + $0x30] sm:$0xf]
  %v304 = vld [vmem:[%s290 + $0x34] sm:$0xf]
  %v305 = vld [vmem:[%s290 + $0x38] sm:$0xf]
  %v306 = vld [vmem:[%s290 + $0x3c] sm:$0xf]
  %v307 = vunpack.c.l.bf16 %v291
  %v308 = vunpack.c.l.bf16 %v292
  %v309 = vunpack.c.l.bf16 %v293
  %v310 = vunpack.c.l.bf16 %v294
  %v311 = vunpack.c.l.bf16 %v295
  %v312 = vunpack.c.l.bf16 %v296
  %v313 = vunpack.c.l.bf16 %v297
  %v314 = vunpack.c.l.bf16 %v298
  %v315 = vunpack.c.l.bf16 %v299
  %v316 = vunpack.c.l.bf16 %v300
  %v317 = vunpack.c.l.bf16 %v301
  %v318 = vunpack.c.l.bf16 %v302
  %v319 = vunpack.c.l.bf16 %v303
  %v320 = vunpack.c.l.bf16 %v304
  %v321 = vunpack.c.l.bf16 %v305
  %v322 = vunpack.c.l.bf16 %v306
  %v323 = vpack.c.bf16 %v287, %v286
  %v324 = vpack.c.bf16 %v289, %v288
  %325 = vmatpush.bf16.msra.mxu0 0
  %326 = vmatpush.bf16.msra.mxu0 0
  %327 = vmatpush.bf16.msra.mxu0 0
  %328 = vmatpush.bf16.msra.mxu0 0
  %329 = vmatpush.bf16.msra.mxu0 0
  %330 = vmatpush.bf16.msra.mxu0 0
  %331 = vmatpush.bf16.msra.mxu0 %v324
  %332 = vmatpush.bf16.msra.mxu0 %v323
  %333 = vmatmul.bf16.gmra.mxu0 %v130
  %v334 = vpop.f32.mrf.mxu0
  %v335 = vadd.f32 0.0, %v334
  %v336 = vpop.f32.mrf.mxu0
  %v337 = vadd.f32 0.0, %v336
  %338 = vmatmul.bf16.gmra.mxu0 %v133
  %v339 = vpop.f32.mrf.mxu0
  %v340 = vadd.f32 0.0, %v339
  %v341 = vpop.f32.mrf.mxu0
  %v342 = vadd.f32 0.0, %v341
  %343 = vmatmul.bf16.gmra.mxu0 %v136
  %v344 = vpop.f32.mrf.mxu0
  %v345 = vadd.f32 0.0, %v344
  %v346 = vpop.f32.mrf.mxu0
  %v347 = vadd.f32 0.0, %v346
  %348 = vmatmul.bf16.gmra.mxu0 %v139
  %v349 = vpop.f32.mrf.mxu0
  %v350 = vadd.f32 0.0, %v349
  %v351 = vpop.f32.mrf.mxu0
  %v352 = vadd.f32 0.0, %v351
  %353 = vmatmul.bf16.gmra.mxu0 %v142
  %v354 = vpop.f32.mrf.mxu0
  %v355 = vadd.f32 0.0, %v354
  %v356 = vpop.f32.mrf.mxu0
  %v357 = vadd.f32 0.0, %v356
  %358 = vmatmul.bf16.gmra.mxu0 %v145
  %v359 = vpop.f32.mrf.mxu0
  %v360 = vadd.f32 0.0, %v359
  %v361 = vpop.f32.mrf.mxu0
  %v362 = vadd.f32 0.0, %v361
  %363 = vmatmul.bf16.gmra.mxu0 %v148
  %v364 = vpop.f32.mrf.mxu0
  %v365 = vadd.f32 0.0, %v364
  %v366 = vpop.f32.mrf.mxu0
  %v367 = vadd.f32 0.0, %v366
  %368 = vmatmul.bf16.gmra.mxu0 %v151
  %v369 = vpop.f32.mrf.mxu0
  %v370 = vadd.f32 0.0, %v369
  %v371 = vpop.f32.mrf.mxu0
  %v372 = vadd.f32 0.0, %v371
  %373 = vdwg.mxu0
  %v374 = vadd.f32 %v307, %v335
  %v375 = vadd.f32 %v308, %v337
  %v376 = vadd.f32 %v309, %v340
  %v377 = vadd.f32 %v310, %v342
  %v378 = vadd.f32 %v311, %v345
  %v379 = vadd.f32 %v312, %v347
  %v380 = vadd.f32 %v313, %v350
  %v381 = vadd.f32 %v314, %v352
  %v382 = vadd.f32 %v315, %v355
  %v383 = vadd.f32 %v316, %v357
  %v384 = vadd.f32 %v317, %v360
  %v385 = vadd.f32 %v318, %v362
  %v386 = vadd.f32 %v319, %v365
  %v387 = vadd.f32 %v320, %v367
  %v388 = vadd.f32 %v321, %v370
  %v389 = vadd.f32 %v322, %v372
  %v390 = vmul.f32 %v374, 0.5
  %v391 = vmul.f32 %v375, 0.5
  %v392 = vmul.f32 %v376, 0.5
  %v393 = vmul.f32 %v377, 0.5
  %v394 = vtanh.pop %v390
  %v395 = vtanh.pop %v391
  %v396 = vtanh.pop %v392
  %v397 = vtanh.pop %v393
  %v398 = vmul.f32 %v394, 0.5
  %v399 = vmul.f32 %v395, 0.5
  %v400 = vmul.f32 %v396, 0.5
  %v401 = vmul.f32 %v397, 0.5
  %v402 = vadd.f32 %v398, 0.5
  %v403 = vadd.f32 %v399, 0.5
  %v404 = vadd.f32 %v400, 0.5
  %v405 = vadd.f32 %v401, 0.5
  %v406 = vmul.f32 %v378, 0.5
  %v407 = vmul.f32 %v379, 0.5
  %v408 = vmul.f32 %v380, 0.5
  %v409 = vmul.f32 %v381, 0.5
  %v410 = vtanh.pop %v406
  %v411 = vtanh.pop %v407
  %v412 = vtanh.pop %v408
  %v413 = vtanh.pop %v409
  %v414 = vmul.f32 %v410, 0.5
  %v415 = vmul.f32 %v411, 0.5
  %v416 = vmul.f32 %v412, 0.5
  %v417 = vmul.f32 %v413, 0.5
  %v418 = vadd.f32 %v414, 0.5
  %v419 = vadd.f32 %v415, 0.5
  %v420 = vadd.f32 %v416, 0.5
  %v421 = vadd.f32 %v417, 0.5
  %v422 = vtanh.pop %v382
  %v423 = vtanh.pop %v383
  %v424 = vtanh.pop %v384
  %v425 = vtanh.pop %v385
  %v426 = vmul.f32 %v386, 0.5
  %v427 = vmul.f32 %v387, 0.5
  %v428 = vmul.f32 %v388, 0.5
  %v429 = vmul.f32 %v389, 0.5
  %v430 = vtanh.pop %v426
  %v431 = vtanh.pop %v427
  %v432 = vtanh.pop %v428
  %v433 = vtanh.pop %v429
  %v434 = vmul.f32 %v430, 0.5
  %v435 = vmul.f32 %v431, 0.5
  %v436 = vmul.f32 %v432, 0.5
  %v437 = vmul.f32 %v433, 0.5
  %v438 = vadd.f32 %v434, 0.5
  %v439 = vadd.f32 %v435, 0.5
  %v440 = vadd.f32 %v436, 0.5
  %v441 = vadd.f32 %v437, 0.5
  %v442 = vmul.f32 %v418, %v278
  %v443 = vmul.f32 %v419, %v279
  %v444 = vmul.f32 %v420, %v280
  %v445 = vmul.f32 %v421, %v281
  %v446 = vmul.f32 %v402, %v422
  %v447 = vmul.f32 %v403, %v423
  %v448 = vmul.f32 %v404, %v424
  %v449 = vmul.f32 %v405, %v425
  %v450 = vadd.f32 %v442, %v446
  %v451 = vadd.f32 %v443, %v447
  %v452 = vadd.f32 %v444, %v448
  %v453 = vadd.f32 %v445, %v449
  %v454 = vtanh.pop %v450
  %v455 = vtanh.pop %v451
  %v456 = vtanh.pop %v452
  %v457 = vtanh.pop %v453
  %v458 = vmul.f32 %v438, %v454
  %v459 = vmul.f32 %v439, %v455
  %v460 = vmul.f32 %v440, %v456
  %v461 = vmul.f32 %v441, %v457
  %s462 = scalar_lea.vmem %s0, 128
  %v463 = vld [vmem:[%s462] sm:$0xf]
  %v464 = vld [vmem:[%s462 + $0x4] sm:$0xf]
  %v465 = vld [vmem:[%s462 + $0x8] sm:$0xf]
  %v466 = vld [vmem:[%s462 + $0xc] sm:$0xf]
  %v467 = vld [vmem:[%s462 + $0x10] sm:$0xf]
  %v468 = vld [vmem:[%s462 + $0x14] sm:$0xf]
  %v469 = vld [vmem:[%s462 + $0x18] sm:$0xf]
  %v470 = vld [vmem:[%s462 + $0x1c] sm:$0xf]
  %v471 = vld [vmem:[%s462 + $0x20] sm:$0xf]
  %v472 = vld [vmem:[%s462 + $0x24] sm:$0xf]
  %v473 = vld [vmem:[%s462 + $0x28] sm:$0xf]
  %v474 = vld [vmem:[%s462 + $0x2c] sm:$0xf]
  %v475 = vld [vmem:[%s462 + $0x30] sm:$0xf]
  %v476 = vld [vmem:[%s462 + $0x34] sm:$0xf]
  %v477 = vld [vmem:[%s462 + $0x38] sm:$0xf]
  %v478 = vld [vmem:[%s462 + $0x3c] sm:$0xf]
  %v479 = vunpack.c.l.bf16 %v463
  %v480 = vunpack.c.l.bf16 %v464
  %v481 = vunpack.c.l.bf16 %v465
  %v482 = vunpack.c.l.bf16 %v466
  %v483 = vunpack.c.l.bf16 %v467
  %v484 = vunpack.c.l.bf16 %v468
  %v485 = vunpack.c.l.bf16 %v469
  %v486 = vunpack.c.l.bf16 %v470
  %v487 = vunpack.c.l.bf16 %v471
  %v488 = vunpack.c.l.bf16 %v472
  %v489 = vunpack.c.l.bf16 %v473
  %v490 = vunpack.c.l.bf16 %v474
  %v491 = vunpack.c.l.bf16 %v475
  %v492 = vunpack.c.l.bf16 %v476
  %v493 = vunpack.c.l.bf16 %v477
  %v494 = vunpack.c.l.bf16 %v478
  %v495 = vpack.c.bf16 %v459, %v458
  %v496 = vpack.c.bf16 %v461, %v460
  %497 = vmatpush.bf16.msra.mxu0 0
  %498 = vmatpush.bf16.msra.mxu0 0
  %499 = vmatpush.bf16.msra.mxu0 0
  %500 = vmatpush.bf16.msra.mxu0 0
  %501 = vmatpush.bf16.msra.mxu0 0
  %502 = vmatpush.bf16.msra.mxu0 0
  %503 = vmatpush.bf16.msra.mxu0 %v496
  %504 = vmatpush.bf16.msra.mxu0 %v495
  %505 = vmatmul.bf16.gmra.mxu0 %v130
  %v506 = vpop.f32.mrf.mxu0
  %v507 = vadd.f32 0.0, %v506
  %v508 = vpop.f32.mrf.mxu0
  %v509 = vadd.f32 0.0, %v508
  %510 = vmatmul.bf16.gmra.mxu0 %v133
  %v511 = vpop.f32.mrf.mxu0
  %v512 = vadd.f32 0.0, %v511
  %v513 = vpop.f32.mrf.mxu0
  %v514 = vadd.f32 0.0, %v513
  %515 = vmatmul.bf16.gmra.mxu0 %v136
  %v516 = vpop.f32.mrf.mxu0
  %v517 = vadd.f32 0.0, %v516
  %v518 = vpop.f32.mrf.mxu0
  %v519 = vadd.f32 0.0, %v518
  %520 = vmatmul.bf16.gmra.mxu0 %v139
  %v521 = vpop.f32.mrf.mxu0
  %v522 = vadd.f32 0.0, %v521
  %v523 = vpop.f32.mrf.mxu0
  %v524 = vadd.f32 0.0, %v523
  %525 = vmatmul.bf16.gmra.mxu0 %v142
  %v526 = vpop.f32.mrf.mxu0
  %v527 = vadd.f32 0.0, %v526
  %v528 = vpop.f32.mrf.mxu0
  %v529 = vadd.f32 0.0, %v528
  %530 = vmatmul.bf16.gmra.mxu0 %v145
  %v531 = vpop.f32.mrf.mxu0
  %v532 = vadd.f32 0.0, %v531
  %v533 = vpop.f32.mrf.mxu0
  %v534 = vadd.f32 0.0, %v533
  %535 = vmatmul.bf16.gmra.mxu0 %v148
  %v536 = vpop.f32.mrf.mxu0
  %v537 = vadd.f32 0.0, %v536
  %v538 = vpop.f32.mrf.mxu0
  %v539 = vadd.f32 0.0, %v538
  %540 = vmatmul.bf16.gmra.mxu0 %v151
  %v541 = vpop.f32.mrf.mxu0
  %v542 = vadd.f32 0.0, %v541
  %v543 = vpop.f32.mrf.mxu0
  %v544 = vadd.f32 0.0, %v543
  %545 = vdwg.mxu0
  %v546 = vadd.f32 %v479, %v507
  %v547 = vadd.f32 %v480, %v509
  %v548 = vadd.f32 %v481, %v512
  %v549 = vadd.f32 %v482, %v514
  %v550 = vadd.f32 %v483, %v517
  %v551 = vadd.f32 %v484, %v519
  %v552 = vadd.f32 %v485, %v522
  %v553 = vadd.f32 %v486, %v524
  %v554 = vadd.f32 %v487, %v527
  %v555 = vadd.f32 %v488, %v529
  %v556 = vadd.f32 %v489, %v532
  %v557 = vadd.f32 %v490, %v534
  %v558 = vadd.f32 %v491, %v537
  %v559 = vadd.f32 %v492, %v539
  %v560 = vadd.f32 %v493, %v542
  %v561 = vadd.f32 %v494, %v544
  %v562 = vmul.f32 %v546, 0.5
  %v563 = vmul.f32 %v547, 0.5
  %v564 = vmul.f32 %v548, 0.5
  %v565 = vmul.f32 %v549, 0.5
  %v566 = vtanh.pop %v562
  %v567 = vtanh.pop %v563
  %v568 = vtanh.pop %v564
  %v569 = vtanh.pop %v565
  %v570 = vmul.f32 %v566, 0.5
  %v571 = vmul.f32 %v567, 0.5
  %v572 = vmul.f32 %v568, 0.5
  %v573 = vmul.f32 %v569, 0.5
  %v574 = vadd.f32 %v570, 0.5
  %v575 = vadd.f32 %v571, 0.5
  %v576 = vadd.f32 %v572, 0.5
  %v577 = vadd.f32 %v573, 0.5
  %v578 = vmul.f32 %v550, 0.5
  %v579 = vmul.f32 %v551, 0.5
  %v580 = vmul.f32 %v552, 0.5
  %v581 = vmul.f32 %v553, 0.5
  %v582 = vtanh.pop %v578
  %v583 = vtanh.pop %v579
  %v584 = vtanh.pop %v580
  %v585 = vtanh.pop %v581
  %v586 = vmul.f32 %v582, 0.5
  %v587 = vmul.f32 %v583, 0.5
  %v588 = vmul.f32 %v584, 0.5
  %v589 = vmul.f32 %v585, 0.5
  %v590 = vadd.f32 %v586, 0.5
  %v591 = vadd.f32 %v587, 0.5
  %v592 = vadd.f32 %v588, 0.5
  %v593 = vadd.f32 %v589, 0.5
  %v594 = vtanh.pop %v554
  %v595 = vtanh.pop %v555
  %v596 = vtanh.pop %v556
  %v597 = vtanh.pop %v557
  %v598 = vmul.f32 %v558, 0.5
  %v599 = vmul.f32 %v559, 0.5
  %v600 = vmul.f32 %v560, 0.5
  %v601 = vmul.f32 %v561, 0.5
  %v602 = vtanh.pop %v598
  %v603 = vtanh.pop %v599
  %v604 = vtanh.pop %v600
  %v605 = vtanh.pop %v601
  %v606 = vmul.f32 %v602, 0.5
  %v607 = vmul.f32 %v603, 0.5
  %v608 = vmul.f32 %v604, 0.5
  %v609 = vmul.f32 %v605, 0.5
  %v610 = vadd.f32 %v606, 0.5
  %v611 = vadd.f32 %v607, 0.5
  %v612 = vadd.f32 %v608, 0.5
  %v613 = vadd.f32 %v609, 0.5
  %v614 = vmul.f32 %v590, %v450
  %v615 = vmul.f32 %v591, %v451
  %v616 = vmul.f32 %v592, %v452
  %v617 = vmul.f32 %v593, %v453
  %v618 = vmul.f32 %v574, %v594
  %v619 = vmul.f32 %v575, %v595
  %v620 = vmul.f32 %v576, %v596
  %v621 = vmul.f32 %v577, %v597
  %v622 = vadd.f32 %v614, %v618
  %v623 = vadd.f32 %v615, %v619
  %v624 = vadd.f32 %v616, %v620
  %v625 = vadd.f32 %v617, %v621
  %v626 = vtanh.pop %v622
  %v627 = vtanh.pop %v623
  %v628 = vtanh.pop %v624
  %v629 = vtanh.pop %v625
  %v630 = vmul.f32 %v610, %v626
  %v631 = vmul.f32 %v611, %v627
  %v632 = vmul.f32 %v612, %v628
  %v633 = vmul.f32 %v613, %v629
  %s634 = scalar_lea.vmem %s0, 192
  %v635 = vld [vmem:[%s634] sm:$0xf]
  %v636 = vld [vmem:[%s634 + $0x4] sm:$0xf]
  %v637 = vld [vmem:[%s634 + $0x8] sm:$0xf]
  %v638 = vld [vmem:[%s634 + $0xc] sm:$0xf]
  %v639 = vld [vmem:[%s634 + $0x10] sm:$0xf]
  %v640 = vld [vmem:[%s634 + $0x14] sm:$0xf]
  %v641 = vld [vmem:[%s634 + $0x18] sm:$0xf]
  %v642 = vld [vmem:[%s634 + $0x1c] sm:$0xf]
  %v643 = vld [vmem:[%s634 + $0x20] sm:$0xf]
  %v644 = vld [vmem:[%s634 + $0x24] sm:$0xf]
  %v645 = vld [vmem:[%s634 + $0x28] sm:$0xf]
  %v646 = vld [vmem:[%s634 + $0x2c] sm:$0xf]
  %v647 = vld [vmem:[%s634 + $0x30] sm:$0xf]
  %v648 = vld [vmem:[%s634 + $0x34] sm:$0xf]
  %v649 = vld [vmem:[%s634 + $0x38] sm:$0xf]
  %v650 = vld [vmem:[%s634 + $0x3c] sm:$0xf]
  %v651 = vunpack.c.l.bf16 %v635
  %v652 = vunpack.c.l.bf16 %v636
  %v653 = vunpack.c.l.bf16 %v637
  %v654 = vunpack.c.l.bf16 %v638
  %v655 = vunpack.c.l.bf16 %v639
  %v656 = vunpack.c.l.bf16 %v640
  %v657 = vunpack.c.l.bf16 %v641
  %v658 = vunpack.c.l.bf16 %v642
  %v659 = vunpack.c.l.bf16 %v643
  %v660 = vunpack.c.l.bf16 %v644
  %v661 = vunpack.c.l.bf16 %v645
  %v662 = vunpack.c.l.bf16 %v646
  %v663 = vunpack.c.l.bf16 %v647
  %v664 = vunpack.c.l.bf16 %v648
  %v665 = vunpack.c.l.bf16 %v649
  %v666 = vunpack.c.l.bf16 %v650
  %v667 = vpack.c.bf16 %v631, %v630
  %v668 = vpack.c.bf16 %v633, %v632
  %669 = vmatpush.bf16.msra.mxu0 0
  %670 = vmatpush.bf16.msra.mxu0 0
  %671 = vmatpush.bf16.msra.mxu0 0
  %672 = vmatpush.bf16.msra.mxu0 0
  %673 = vmatpush.bf16.msra.mxu0 0
  %674 = vmatpush.bf16.msra.mxu0 0
  %675 = vmatpush.bf16.msra.mxu0 %v668
  %676 = vmatpush.bf16.msra.mxu0 %v667
  %677 = vmatmul.bf16.gmra.mxu0 %v130
  %v678 = vpop.f32.mrf.mxu0
  %v679 = vadd.f32 0.0, %v678
  %v680 = vpop.f32.mrf.mxu0
  %v681 = vadd.f32 0.0, %v680
  %682 = vmatmul.bf16.gmra.mxu0 %v133
  %v683 = vpop.f32.mrf.mxu0
  %v684 = vadd.f32 0.0, %v683
  %v685 = vpop.f32.mrf.mxu0
  %v686 = vadd.f32 0.0, %v685
  %687 = vmatmul.bf16.gmra.mxu0 %v136
  %v688 = vpop.f32.mrf.mxu0
  %v689 = vadd.f32 0.0, %v688
  %v690 = vpop.f32.mrf.mxu0
  %v691 = vadd.f32 0.0, %v690
  %692 = vmatmul.bf16.gmra.mxu0 %v139
  %v693 = vpop.f32.mrf.mxu0
  %v694 = vadd.f32 0.0, %v693
  %v695 = vpop.f32.mrf.mxu0
  %v696 = vadd.f32 0.0, %v695
  %697 = vmatmul.bf16.gmra.mxu0 %v142
  %v698 = vpop.f32.mrf.mxu0
  %v699 = vadd.f32 0.0, %v698
  %v700 = vpop.f32.mrf.mxu0
  %v701 = vadd.f32 0.0, %v700
  %702 = vmatmul.bf16.gmra.mxu0 %v145
  %v703 = vpop.f32.mrf.mxu0
  %v704 = vadd.f32 0.0, %v703
  %v705 = vpop.f32.mrf.mxu0
  %v706 = vadd.f32 0.0, %v705
  %707 = vmatmul.bf16.gmra.mxu0 %v148
  %v708 = vpop.f32.mrf.mxu0
  %v709 = vadd.f32 0.0, %v708
  %v710 = vpop.f32.mrf.mxu0
  %v711 = vadd.f32 0.0, %v710
  %712 = vmatmul.bf16.gmra.mxu0 %v151
  %v713 = vpop.f32.mrf.mxu0
  %v714 = vadd.f32 0.0, %v713
  %v715 = vpop.f32.mrf.mxu0
  %v716 = vadd.f32 0.0, %v715
  %717 = vdwg.mxu0
  %v718 = vadd.f32 %v651, %v679
  %v719 = vadd.f32 %v652, %v681
  %v720 = vadd.f32 %v653, %v684
  %v721 = vadd.f32 %v654, %v686
  %v722 = vadd.f32 %v655, %v689
  %v723 = vadd.f32 %v656, %v691
  %v724 = vadd.f32 %v657, %v694
  %v725 = vadd.f32 %v658, %v696
  %v726 = vadd.f32 %v659, %v699
  %v727 = vadd.f32 %v660, %v701
  %v728 = vadd.f32 %v661, %v704
  %v729 = vadd.f32 %v662, %v706
  %v730 = vadd.f32 %v663, %v709
  %v731 = vadd.f32 %v664, %v711
  %v732 = vadd.f32 %v665, %v714
  %v733 = vadd.f32 %v666, %v716
  %v734 = vmul.f32 %v718, 0.5
  %v735 = vmul.f32 %v719, 0.5
  %v736 = vmul.f32 %v720, 0.5
  %v737 = vmul.f32 %v721, 0.5
  %v738 = vtanh.pop %v734
  %v739 = vtanh.pop %v735
  %v740 = vtanh.pop %v736
  %v741 = vtanh.pop %v737
  %v742 = vmul.f32 %v738, 0.5
  %v743 = vmul.f32 %v739, 0.5
  %v744 = vmul.f32 %v740, 0.5
  %v745 = vmul.f32 %v741, 0.5
  %v746 = vadd.f32 %v742, 0.5
  %v747 = vadd.f32 %v743, 0.5
  %v748 = vadd.f32 %v744, 0.5
  %v749 = vadd.f32 %v745, 0.5
  %v750 = vmul.f32 %v722, 0.5
  %v751 = vmul.f32 %v723, 0.5
  %v752 = vmul.f32 %v724, 0.5
  %v753 = vmul.f32 %v725, 0.5
  %v754 = vtanh.pop %v750
  %v755 = vtanh.pop %v751
  %v756 = vtanh.pop %v752
  %v757 = vtanh.pop %v753
  %v758 = vmul.f32 %v754, 0.5
  %v759 = vmul.f32 %v755, 0.5
  %v760 = vmul.f32 %v756, 0.5
  %v761 = vmul.f32 %v757, 0.5
  %v762 = vadd.f32 %v758, 0.5
  %v763 = vadd.f32 %v759, 0.5
  %v764 = vadd.f32 %v760, 0.5
  %v765 = vadd.f32 %v761, 0.5
  %v766 = vtanh.pop %v726
  %v767 = vtanh.pop %v727
  %v768 = vtanh.pop %v728
  %v769 = vtanh.pop %v729
  %v770 = vmul.f32 %v730, 0.5
  %v771 = vmul.f32 %v731, 0.5
  %v772 = vmul.f32 %v732, 0.5
  %v773 = vmul.f32 %v733, 0.5
  %v774 = vtanh.pop %v770
  %v775 = vtanh.pop %v771
  %v776 = vtanh.pop %v772
  %v777 = vtanh.pop %v773
  %v778 = vmul.f32 %v774, 0.5
  %v779 = vmul.f32 %v775, 0.5
  %v780 = vmul.f32 %v776, 0.5
  %v781 = vmul.f32 %v777, 0.5
  %v782 = vadd.f32 %v778, 0.5
  %v783 = vadd.f32 %v779, 0.5
  %v784 = vadd.f32 %v780, 0.5
  %v785 = vadd.f32 %v781, 0.5
  %v786 = vmul.f32 %v762, %v622
  %v787 = vmul.f32 %v763, %v623
  %v788 = vmul.f32 %v764, %v624
  %v789 = vmul.f32 %v765, %v625
  %v790 = vmul.f32 %v746, %v766
  %v791 = vmul.f32 %v747, %v767
  %v792 = vmul.f32 %v748, %v768
  %v793 = vmul.f32 %v749, %v769
  %v794 = vadd.f32 %v786, %v790
  %v795 = vadd.f32 %v787, %v791
  %v796 = vadd.f32 %v788, %v792
  %v797 = vadd.f32 %v789, %v793
  %v798 = vtanh.pop %v794
  %v799 = vtanh.pop %v795
  %v800 = vtanh.pop %v796
  %v801 = vtanh.pop %v797
  %v802 = vmul.f32 %v782, %v798
  %v803 = vmul.f32 %v783, %v799
  %v804 = vmul.f32 %v784, %v800
  %v805 = vmul.f32 %v785, %v801
  %s806 = scalar_lea.vmem %s0, 256
  %v807 = vld [vmem:[%s806] sm:$0xf]
  %v808 = vld [vmem:[%s806 + $0x4] sm:$0xf]
  %v809 = vld [vmem:[%s806 + $0x8] sm:$0xf]
  %v810 = vld [vmem:[%s806 + $0xc] sm:$0xf]
  %v811 = vld [vmem:[%s806 + $0x10] sm:$0xf]
  %v812 = vld [vmem:[%s806 + $0x14] sm:$0xf]
  %v813 = vld [vmem:[%s806 + $0x18] sm:$0xf]
  %v814 = vld [vmem:[%s806 + $0x1c] sm:$0xf]
  %v815 = vld [vmem:[%s806 + $0x20] sm:$0xf]
  %v816 = vld [vmem:[%s806 + $0x24] sm:$0xf]
  %v817 = vld [vmem:[%s806 + $0x28] sm:$0xf]
  %v818 = vld [vmem:[%s806 + $0x2c] sm:$0xf]
  %v819 = vld [vmem:[%s806 + $0x30] sm:$0xf]
  %v820 = vld [vmem:[%s806 + $0x34] sm:$0xf]
  %v821 = vld [vmem:[%s806 + $0x38] sm:$0xf]
  %v822 = vld [vmem:[%s806 + $0x3c] sm:$0xf]
  %v823 = vunpack.c.l.bf16 %v807
  %v824 = vunpack.c.l.bf16 %v808
  %v825 = vunpack.c.l.bf16 %v809
  %v826 = vunpack.c.l.bf16 %v810
  %v827 = vunpack.c.l.bf16 %v811
  %v828 = vunpack.c.l.bf16 %v812
  %v829 = vunpack.c.l.bf16 %v813
  %v830 = vunpack.c.l.bf16 %v814
  %v831 = vunpack.c.l.bf16 %v815
  %v832 = vunpack.c.l.bf16 %v816
  %v833 = vunpack.c.l.bf16 %v817
  %v834 = vunpack.c.l.bf16 %v818
  %v835 = vunpack.c.l.bf16 %v819
  %v836 = vunpack.c.l.bf16 %v820
  %v837 = vunpack.c.l.bf16 %v821
  %v838 = vunpack.c.l.bf16 %v822
  %v839 = vpack.c.bf16 %v803, %v802
  %v840 = vpack.c.bf16 %v805, %v804
  %841 = vmatpush.bf16.msra.mxu0 0
  %842 = vmatpush.bf16.msra.mxu0 0
  %843 = vmatpush.bf16.msra.mxu0 0
  %844 = vmatpush.bf16.msra.mxu0 0
  %845 = vmatpush.bf16.msra.mxu0 0
  %846 = vmatpush.bf16.msra.mxu0 0
  %847 = vmatpush.bf16.msra.mxu0 %v840
  %848 = vmatpush.bf16.msra.mxu0 %v839
  %849 = vmatmul.bf16.gmra.mxu0 %v130
  %v850 = vpop.f32.mrf.mxu0
  %v851 = vadd.f32 0.0, %v850
  %v852 = vpop.f32.mrf.mxu0
  %v853 = vadd.f32 0.0, %v852
  %854 = vmatmul.bf16.gmra.mxu0 %v133
  %v855 = vpop.f32.mrf.mxu0
  %v856 = vadd.f32 0.0, %v855
  %v857 = vpop.f32.mrf.mxu0
  %v858 = vadd.f32 0.0, %v857
  %859 = vmatmul.bf16.gmra.mxu0 %v136
  %v860 = vpop.f32.mrf.mxu0
  %v861 = vadd.f32 0.0, %v860
  %v862 = vpop.f32.mrf.mxu0
  %v863 = vadd.f32 0.0, %v862
  %864 = vmatmul.bf16.gmra.mxu0 %v139
  %v865 = vpop.f32.mrf.mxu0
  %v866 = vadd.f32 0.0, %v865
  %v867 = vpop.f32.mrf.mxu0
  %v868 = vadd.f32 0.0, %v867
  %869 = vmatmul.bf16.gmra.mxu0 %v142
  %v870 = vpop.f32.mrf.mxu0
  %v871 = vadd.f32 0.0, %v870
  %v872 = vpop.f32.mrf.mxu0
  %v873 = vadd.f32 0.0, %v872
  %874 = vmatmul.bf16.gmra.mxu0 %v145
  %v875 = vpop.f32.mrf.mxu0
  %v876 = vadd.f32 0.0, %v875
  %v877 = vpop.f32.mrf.mxu0
  %v878 = vadd.f32 0.0, %v877
  %879 = vmatmul.bf16.gmra.mxu0 %v148
  %v880 = vpop.f32.mrf.mxu0
  %v881 = vadd.f32 0.0, %v880
  %v882 = vpop.f32.mrf.mxu0
  %v883 = vadd.f32 0.0, %v882
  %884 = vmatmul.bf16.gmra.mxu0 %v151
  %v885 = vpop.f32.mrf.mxu0
  %v886 = vadd.f32 0.0, %v885
  %v887 = vpop.f32.mrf.mxu0
  %v888 = vadd.f32 0.0, %v887
  %889 = vdwg.mxu0
  %v890 = vadd.f32 %v823, %v851
  %v891 = vadd.f32 %v824, %v853
  %v892 = vadd.f32 %v825, %v856
  %v893 = vadd.f32 %v826, %v858
  %v894 = vadd.f32 %v827, %v861
  %v895 = vadd.f32 %v828, %v863
  %v896 = vadd.f32 %v829, %v866
  %v897 = vadd.f32 %v830, %v868
  %v898 = vadd.f32 %v831, %v871
  %v899 = vadd.f32 %v832, %v873
  %v900 = vadd.f32 %v833, %v876
  %v901 = vadd.f32 %v834, %v878
  %v902 = vadd.f32 %v835, %v881
  %v903 = vadd.f32 %v836, %v883
  %v904 = vadd.f32 %v837, %v886
  %v905 = vadd.f32 %v838, %v888
  %v906 = vmul.f32 %v890, 0.5
  %v907 = vmul.f32 %v891, 0.5
  %v908 = vmul.f32 %v892, 0.5
  %v909 = vmul.f32 %v893, 0.5
  %v910 = vtanh.pop %v906
  %v911 = vtanh.pop %v907
  %v912 = vtanh.pop %v908
  %v913 = vtanh.pop %v909
  %v914 = vmul.f32 %v910, 0.5
  %v915 = vmul.f32 %v911, 0.5
  %v916 = vmul.f32 %v912, 0.5
  %v917 = vmul.f32 %v913, 0.5
  %v918 = vadd.f32 %v914, 0.5
  %v919 = vadd.f32 %v915, 0.5
  %v920 = vadd.f32 %v916, 0.5
  %v921 = vadd.f32 %v917, 0.5
  %v922 = vmul.f32 %v894, 0.5
  %v923 = vmul.f32 %v895, 0.5
  %v924 = vmul.f32 %v896, 0.5
  %v925 = vmul.f32 %v897, 0.5
  %v926 = vtanh.pop %v922
  %v927 = vtanh.pop %v923
  %v928 = vtanh.pop %v924
  %v929 = vtanh.pop %v925
  %v930 = vmul.f32 %v926, 0.5
  %v931 = vmul.f32 %v927, 0.5
  %v932 = vmul.f32 %v928, 0.5
  %v933 = vmul.f32 %v929, 0.5
  %v934 = vadd.f32 %v930, 0.5
  %v935 = vadd.f32 %v931, 0.5
  %v936 = vadd.f32 %v932, 0.5
  %v937 = vadd.f32 %v933, 0.5
  %v938 = vtanh.pop %v898
  %v939 = vtanh.pop %v899
  %v940 = vtanh.pop %v900
  %v941 = vtanh.pop %v901
  %v942 = vmul.f32 %v902, 0.5
  %v943 = vmul.f32 %v903, 0.5
  %v944 = vmul.f32 %v904, 0.5
  %v945 = vmul.f32 %v905, 0.5
  %v946 = vtanh.pop %v942
  %v947 = vtanh.pop %v943
  %v948 = vtanh.pop %v944
  %v949 = vtanh.pop %v945
  %v950 = vmul.f32 %v946, 0.5
  %v951 = vmul.f32 %v947, 0.5
  %v952 = vmul.f32 %v948, 0.5
  %v953 = vmul.f32 %v949, 0.5
  %v954 = vadd.f32 %v950, 0.5
  %v955 = vadd.f32 %v951, 0.5
  %v956 = vadd.f32 %v952, 0.5
  %v957 = vadd.f32 %v953, 0.5
  %v958 = vmul.f32 %v934, %v794
  %v959 = vmul.f32 %v935, %v795
  %v960 = vmul.f32 %v936, %v796
  %v961 = vmul.f32 %v937, %v797
  %v962 = vmul.f32 %v918, %v938
  %v963 = vmul.f32 %v919, %v939
  %v964 = vmul.f32 %v920, %v940
  %v965 = vmul.f32 %v921, %v941
  %v966 = vadd.f32 %v958, %v962
  %v967 = vadd.f32 %v959, %v963
  %v968 = vadd.f32 %v960, %v964
  %v969 = vadd.f32 %v961, %v965
  %v970 = vtanh.pop %v966
  %v971 = vtanh.pop %v967
  %v972 = vtanh.pop %v968
  %v973 = vtanh.pop %v969
  %v974 = vmul.f32 %v954, %v970
  %v975 = vmul.f32 %v955, %v971
  %v976 = vmul.f32 %v956, %v972
  %v977 = vmul.f32 %v957, %v973
  %s978 = scalar_lea.vmem %s0, 320
  %v979 = vld [vmem:[%s978] sm:$0xf]
  %v980 = vld [vmem:[%s978 + $0x4] sm:$0xf]
  %v981 = vld [vmem:[%s978 + $0x8] sm:$0xf]
  %v982 = vld [vmem:[%s978 + $0xc] sm:$0xf]
  %v983 = vld [vmem:[%s978 + $0x10] sm:$0xf]
  %v984 = vld [vmem:[%s978 + $0x14] sm:$0xf]
  %v985 = vld [vmem:[%s978 + $0x18] sm:$0xf]
  %v986 = vld [vmem:[%s978 + $0x1c] sm:$0xf]
  %v987 = vld [vmem:[%s978 + $0x20] sm:$0xf]
  %v988 = vld [vmem:[%s978 + $0x24] sm:$0xf]
  %v989 = vld [vmem:[%s978 + $0x28] sm:$0xf]
  %v990 = vld [vmem:[%s978 + $0x2c] sm:$0xf]
  %v991 = vld [vmem:[%s978 + $0x30] sm:$0xf]
  %v992 = vld [vmem:[%s978 + $0x34] sm:$0xf]
  %v993 = vld [vmem:[%s978 + $0x38] sm:$0xf]
  %v994 = vld [vmem:[%s978 + $0x3c] sm:$0xf]
  %v995 = vunpack.c.l.bf16 %v979
  %v996 = vunpack.c.l.bf16 %v980
  %v997 = vunpack.c.l.bf16 %v981
  %v998 = vunpack.c.l.bf16 %v982
  %v999 = vunpack.c.l.bf16 %v983
  %v1000 = vunpack.c.l.bf16 %v984
  %v1001 = vunpack.c.l.bf16 %v985
  %v1002 = vunpack.c.l.bf16 %v986
  %v1003 = vunpack.c.l.bf16 %v987
  %v1004 = vunpack.c.l.bf16 %v988
  %v1005 = vunpack.c.l.bf16 %v989
  %v1006 = vunpack.c.l.bf16 %v990
  %v1007 = vunpack.c.l.bf16 %v991
  %v1008 = vunpack.c.l.bf16 %v992
  %v1009 = vunpack.c.l.bf16 %v993
  %v1010 = vunpack.c.l.bf16 %v994
  %v1011 = vpack.c.bf16 %v975, %v974
  %v1012 = vpack.c.bf16 %v977, %v976
  %1013 = vmatpush.bf16.msra.mxu0 0
  %1014 = vmatpush.bf16.msra.mxu0 0
  %1015 = vmatpush.bf16.msra.mxu0 0
  %1016 = vmatpush.bf16.msra.mxu0 0
  %1017 = vmatpush.bf16.msra.mxu0 0
  %1018 = vmatpush.bf16.msra.mxu0 0
  %1019 = vmatpush.bf16.msra.mxu0 %v1012
  %1020 = vmatpush.bf16.msra.mxu0 %v1011
  %1021 = vmatmul.bf16.gmra.mxu0 %v130
  %v1022 = vpop.f32.mrf.mxu0
  %v1023 = vadd.f32 0.0, %v1022
  %v1024 = vpop.f32.mrf.mxu0
  %v1025 = vadd.f32 0.0, %v1024
  %1026 = vmatmul.bf16.gmra.mxu0 %v133
  %v1027 = vpop.f32.mrf.mxu0
  %v1028 = vadd.f32 0.0, %v1027
  %v1029 = vpop.f32.mrf.mxu0
  %v1030 = vadd.f32 0.0, %v1029
  %1031 = vmatmul.bf16.gmra.mxu0 %v136
  %v1032 = vpop.f32.mrf.mxu0
  %v1033 = vadd.f32 0.0, %v1032
  %v1034 = vpop.f32.mrf.mxu0
  %v1035 = vadd.f32 0.0, %v1034
  %1036 = vmatmul.bf16.gmra.mxu0 %v139
  %v1037 = vpop.f32.mrf.mxu0
  %v1038 = vadd.f32 0.0, %v1037
  %v1039 = vpop.f32.mrf.mxu0
  %v1040 = vadd.f32 0.0, %v1039
  %1041 = vmatmul.bf16.gmra.mxu0 %v142
  %v1042 = vpop.f32.mrf.mxu0
  %v1043 = vadd.f32 0.0, %v1042
  %v1044 = vpop.f32.mrf.mxu0
  %v1045 = vadd.f32 0.0, %v1044
  %1046 = vmatmul.bf16.gmra.mxu0 %v145
  %v1047 = vpop.f32.mrf.mxu0
  %v1048 = vadd.f32 0.0, %v1047
  %v1049 = vpop.f32.mrf.mxu0
  %v1050 = vadd.f32 0.0, %v1049
  %1051 = vmatmul.bf16.gmra.mxu0 %v148
  %v1052 = vpop.f32.mrf.mxu0
  %v1053 = vadd.f32 0.0, %v1052
  %v1054 = vpop.f32.mrf.mxu0
  %v1055 = vadd.f32 0.0, %v1054
  %1056 = vmatmul.bf16.gmra.mxu0 %v151
  %v1057 = vpop.f32.mrf.mxu0
  %v1058 = vadd.f32 0.0, %v1057
  %v1059 = vpop.f32.mrf.mxu0
  %v1060 = vadd.f32 0.0, %v1059
  %1061 = vdwg.mxu0
  %v1062 = vadd.f32 %v995, %v1023
  %v1063 = vadd.f32 %v996, %v1025
  %v1064 = vadd.f32 %v997, %v1028
  %v1065 = vadd.f32 %v998, %v1030
  %v1066 = vadd.f32 %v999, %v1033
  %v1067 = vadd.f32 %v1000, %v1035
  %v1068 = vadd.f32 %v1001, %v1038
  %v1069 = vadd.f32 %v1002, %v1040
  %v1070 = vadd.f32 %v1003, %v1043
  %v1071 = vadd.f32 %v1004, %v1045
  %v1072 = vadd.f32 %v1005, %v1048
  %v1073 = vadd.f32 %v1006, %v1050
  %v1074 = vadd.f32 %v1007, %v1053
  %v1075 = vadd.f32 %v1008, %v1055
  %v1076 = vadd.f32 %v1009, %v1058
  %v1077 = vadd.f32 %v1010, %v1060
  %v1078 = vmul.f32 %v1062, 0.5
  %v1079 = vmul.f32 %v1063, 0.5
  %v1080 = vmul.f32 %v1064, 0.5
  %v1081 = vmul.f32 %v1065, 0.5
  %v1082 = vtanh.pop %v1078
  %v1083 = vtanh.pop %v1079
  %v1084 = vtanh.pop %v1080
  %v1085 = vtanh.pop %v1081
  %v1086 = vmul.f32 %v1082, 0.5
  %v1087 = vmul.f32 %v1083, 0.5
  %v1088 = vmul.f32 %v1084, 0.5
  %v1089 = vmul.f32 %v1085, 0.5
  %v1090 = vadd.f32 %v1086, 0.5
  %v1091 = vadd.f32 %v1087, 0.5
  %v1092 = vadd.f32 %v1088, 0.5
  %v1093 = vadd.f32 %v1089, 0.5
  %v1094 = vmul.f32 %v1066, 0.5
  %v1095 = vmul.f32 %v1067, 0.5
  %v1096 = vmul.f32 %v1068, 0.5
  %v1097 = vmul.f32 %v1069, 0.5
  %v1098 = vtanh.pop %v1094
  %v1099 = vtanh.pop %v1095
  %v1100 = vtanh.pop %v1096
  %v1101 = vtanh.pop %v1097
  %v1102 = vmul.f32 %v1098, 0.5
  %v1103 = vmul.f32 %v1099, 0.5
  %v1104 = vmul.f32 %v1100, 0.5
  %v1105 = vmul.f32 %v1101, 0.5
  %v1106 = vadd.f32 %v1102, 0.5
  %v1107 = vadd.f32 %v1103, 0.5
  %v1108 = vadd.f32 %v1104, 0.5
  %v1109 = vadd.f32 %v1105, 0.5
  %v1110 = vtanh.pop %v1070
  %v1111 = vtanh.pop %v1071
  %v1112 = vtanh.pop %v1072
  %v1113 = vtanh.pop %v1073
  %v1114 = vmul.f32 %v1074, 0.5
  %v1115 = vmul.f32 %v1075, 0.5
  %v1116 = vmul.f32 %v1076, 0.5
  %v1117 = vmul.f32 %v1077, 0.5
  %v1118 = vtanh.pop %v1114
  %v1119 = vtanh.pop %v1115
  %v1120 = vtanh.pop %v1116
  %v1121 = vtanh.pop %v1117
  %v1122 = vmul.f32 %v1118, 0.5
  %v1123 = vmul.f32 %v1119, 0.5
  %v1124 = vmul.f32 %v1120, 0.5
  %v1125 = vmul.f32 %v1121, 0.5
  %v1126 = vadd.f32 %v1122, 0.5
  %v1127 = vadd.f32 %v1123, 0.5
  %v1128 = vadd.f32 %v1124, 0.5
  %v1129 = vadd.f32 %v1125, 0.5
  %v1130 = vmul.f32 %v1106, %v966
  %v1131 = vmul.f32 %v1107, %v967
  %v1132 = vmul.f32 %v1108, %v968
  %v1133 = vmul.f32 %v1109, %v969
  %v1134 = vmul.f32 %v1090, %v1110
  %v1135 = vmul.f32 %v1091, %v1111
  %v1136 = vmul.f32 %v1092, %v1112
  %v1137 = vmul.f32 %v1093, %v1113
  %v1138 = vadd.f32 %v1130, %v1134
  %v1139 = vadd.f32 %v1131, %v1135
  %v1140 = vadd.f32 %v1132, %v1136
  %v1141 = vadd.f32 %v1133, %v1137
  %v1142 = vtanh.pop %v1138
  %v1143 = vtanh.pop %v1139
  %v1144 = vtanh.pop %v1140
  %v1145 = vtanh.pop %v1141
  %v1146 = vmul.f32 %v1126, %v1142
  %v1147 = vmul.f32 %v1127, %v1143
  %v1148 = vmul.f32 %v1128, %v1144
  %v1149 = vmul.f32 %v1129, %v1145
  %s1150 = scalar_lea.vmem %s0, 384
  %v1151 = vld [vmem:[%s1150] sm:$0xf]
  %v1152 = vld [vmem:[%s1150 + $0x4] sm:$0xf]
  %v1153 = vld [vmem:[%s1150 + $0x8] sm:$0xf]
  %v1154 = vld [vmem:[%s1150 + $0xc] sm:$0xf]
  %v1155 = vld [vmem:[%s1150 + $0x10] sm:$0xf]
  %v1156 = vld [vmem:[%s1150 + $0x14] sm:$0xf]
  %v1157 = vld [vmem:[%s1150 + $0x18] sm:$0xf]
  %v1158 = vld [vmem:[%s1150 + $0x1c] sm:$0xf]
  %v1159 = vld [vmem:[%s1150 + $0x20] sm:$0xf]
  %v1160 = vld [vmem:[%s1150 + $0x24] sm:$0xf]
  %v1161 = vld [vmem:[%s1150 + $0x28] sm:$0xf]
  %v1162 = vld [vmem:[%s1150 + $0x2c] sm:$0xf]
  %v1163 = vld [vmem:[%s1150 + $0x30] sm:$0xf]
  %v1164 = vld [vmem:[%s1150 + $0x34] sm:$0xf]
  %v1165 = vld [vmem:[%s1150 + $0x38] sm:$0xf]
  %v1166 = vld [vmem:[%s1150 + $0x3c] sm:$0xf]
  %v1167 = vunpack.c.l.bf16 %v1151
  %v1168 = vunpack.c.l.bf16 %v1152
  %v1169 = vunpack.c.l.bf16 %v1153
  %v1170 = vunpack.c.l.bf16 %v1154
  %v1171 = vunpack.c.l.bf16 %v1155
  %v1172 = vunpack.c.l.bf16 %v1156
  %v1173 = vunpack.c.l.bf16 %v1157
  %v1174 = vunpack.c.l.bf16 %v1158
  %v1175 = vunpack.c.l.bf16 %v1159
  %v1176 = vunpack.c.l.bf16 %v1160
  %v1177 = vunpack.c.l.bf16 %v1161
  %v1178 = vunpack.c.l.bf16 %v1162
  %v1179 = vunpack.c.l.bf16 %v1163
  %v1180 = vunpack.c.l.bf16 %v1164
  %v1181 = vunpack.c.l.bf16 %v1165
  %v1182 = vunpack.c.l.bf16 %v1166
  %v1183 = vpack.c.bf16 %v1147, %v1146
  %v1184 = vpack.c.bf16 %v1149, %v1148
  %1185 = vmatpush.bf16.msra.mxu0 0
  %1186 = vmatpush.bf16.msra.mxu0 0
  %1187 = vmatpush.bf16.msra.mxu0 0
  %1188 = vmatpush.bf16.msra.mxu0 0
  %1189 = vmatpush.bf16.msra.mxu0 0
  %1190 = vmatpush.bf16.msra.mxu0 0
  %1191 = vmatpush.bf16.msra.mxu0 %v1184
  %1192 = vmatpush.bf16.msra.mxu0 %v1183
  %1193 = vmatmul.bf16.gmra.mxu0 %v130
  %v1194 = vpop.f32.mrf.mxu0
  %v1195 = vadd.f32 0.0, %v1194
  %v1196 = vpop.f32.mrf.mxu0
  %v1197 = vadd.f32 0.0, %v1196
  %1198 = vmatmul.bf16.gmra.mxu0 %v133
  %v1199 = vpop.f32.mrf.mxu0
  %v1200 = vadd.f32 0.0, %v1199
  %v1201 = vpop.f32.mrf.mxu0
  %v1202 = vadd.f32 0.0, %v1201
  %1203 = vmatmul.bf16.gmra.mxu0 %v136
  %v1204 = vpop.f32.mrf.mxu0
  %v1205 = vadd.f32 0.0, %v1204
  %v1206 = vpop.f32.mrf.mxu0
  %v1207 = vadd.f32 0.0, %v1206
  %1208 = vmatmul.bf16.gmra.mxu0 %v139
  %v1209 = vpop.f32.mrf.mxu0
  %v1210 = vadd.f32 0.0, %v1209
  %v1211 = vpop.f32.mrf.mxu0
  %v1212 = vadd.f32 0.0, %v1211
  %1213 = vmatmul.bf16.gmra.mxu0 %v142
  %v1214 = vpop.f32.mrf.mxu0
  %v1215 = vadd.f32 0.0, %v1214
  %v1216 = vpop.f32.mrf.mxu0
  %v1217 = vadd.f32 0.0, %v1216
  %1218 = vmatmul.bf16.gmra.mxu0 %v145
  %v1219 = vpop.f32.mrf.mxu0
  %v1220 = vadd.f32 0.0, %v1219
  %v1221 = vpop.f32.mrf.mxu0
  %v1222 = vadd.f32 0.0, %v1221
  %1223 = vmatmul.bf16.gmra.mxu0 %v148
  %v1224 = vpop.f32.mrf.mxu0
  %v1225 = vadd.f32 0.0, %v1224
  %v1226 = vpop.f32.mrf.mxu0
  %v1227 = vadd.f32 0.0, %v1226
  %1228 = vmatmul.bf16.gmra.mxu0 %v151
  %v1229 = vpop.f32.mrf.mxu0
  %v1230 = vadd.f32 0.0, %v1229
  %v1231 = vpop.f32.mrf.mxu0
  %v1232 = vadd.f32 0.0, %v1231
  %1233 = vdwg.mxu0
  %v1234 = vadd.f32 %v1167, %v1195
  %v1235 = vadd.f32 %v1168, %v1197
  %v1236 = vadd.f32 %v1169, %v1200
  %v1237 = vadd.f32 %v1170, %v1202
  %v1238 = vadd.f32 %v1171, %v1205
  %v1239 = vadd.f32 %v1172, %v1207
  %v1240 = vadd.f32 %v1173, %v1210
  %v1241 = vadd.f32 %v1174, %v1212
  %v1242 = vadd.f32 %v1175, %v1215
  %v1243 = vadd.f32 %v1176, %v1217
  %v1244 = vadd.f32 %v1177, %v1220
  %v1245 = vadd.f32 %v1178, %v1222
  %v1246 = vadd.f32 %v1179, %v1225
  %v1247 = vadd.f32 %v1180, %v1227
  %v1248 = vadd.f32 %v1181, %v1230
  %v1249 = vadd.f32 %v1182, %v1232
  %v1250 = vmul.f32 %v1234, 0.5
  %v1251 = vmul.f32 %v1235, 0.5
  %v1252 = vmul.f32 %v1236, 0.5
  %v1253 = vmul.f32 %v1237, 0.5
  %v1254 = vtanh.pop %v1250
  %v1255 = vtanh.pop %v1251
  %v1256 = vtanh.pop %v1252
  %v1257 = vtanh.pop %v1253
  %v1258 = vmul.f32 %v1254, 0.5
  %v1259 = vmul.f32 %v1255, 0.5
  %v1260 = vmul.f32 %v1256, 0.5
  %v1261 = vmul.f32 %v1257, 0.5
  %v1262 = vadd.f32 %v1258, 0.5
  %v1263 = vadd.f32 %v1259, 0.5
  %v1264 = vadd.f32 %v1260, 0.5
  %v1265 = vadd.f32 %v1261, 0.5
  %v1266 = vmul.f32 %v1238, 0.5
  %v1267 = vmul.f32 %v1239, 0.5
  %v1268 = vmul.f32 %v1240, 0.5
  %v1269 = vmul.f32 %v1241, 0.5
  %v1270 = vtanh.pop %v1266
  %v1271 = vtanh.pop %v1267
  %v1272 = vtanh.pop %v1268
  %v1273 = vtanh.pop %v1269
  %v1274 = vmul.f32 %v1270, 0.5
  %v1275 = vmul.f32 %v1271, 0.5
  %v1276 = vmul.f32 %v1272, 0.5
  %v1277 = vmul.f32 %v1273, 0.5
  %v1278 = vadd.f32 %v1274, 0.5
  %v1279 = vadd.f32 %v1275, 0.5
  %v1280 = vadd.f32 %v1276, 0.5
  %v1281 = vadd.f32 %v1277, 0.5
  %v1282 = vtanh.pop %v1242
  %v1283 = vtanh.pop %v1243
  %v1284 = vtanh.pop %v1244
  %v1285 = vtanh.pop %v1245
  %v1286 = vmul.f32 %v1246, 0.5
  %v1287 = vmul.f32 %v1247, 0.5
  %v1288 = vmul.f32 %v1248, 0.5
  %v1289 = vmul.f32 %v1249, 0.5
  %v1290 = vtanh.pop %v1286
  %v1291 = vtanh.pop %v1287
  %v1292 = vtanh.pop %v1288
  %v1293 = vtanh.pop %v1289
  %v1294 = vmul.f32 %v1290, 0.5
  %v1295 = vmul.f32 %v1291, 0.5
  %v1296 = vmul.f32 %v1292, 0.5
  %v1297 = vmul.f32 %v1293, 0.5
  %v1298 = vadd.f32 %v1294, 0.5
  %v1299 = vadd.f32 %v1295, 0.5
  %v1300 = vadd.f32 %v1296, 0.5
  %v1301 = vadd.f32 %v1297, 0.5
  %v1302 = vmul.f32 %v1278, %v1138
  %v1303 = vmul.f32 %v1279, %v1139
  %v1304 = vmul.f32 %v1280, %v1140
  %v1305 = vmul.f32 %v1281, %v1141
  %v1306 = vmul.f32 %v1262, %v1282
  %v1307 = vmul.f32 %v1263, %v1283
  %v1308 = vmul.f32 %v1264, %v1284
  %v1309 = vmul.f32 %v1265, %v1285
  %v1310 = vadd.f32 %v1302, %v1306
  %v1311 = vadd.f32 %v1303, %v1307
  %v1312 = vadd.f32 %v1304, %v1308
  %v1313 = vadd.f32 %v1305, %v1309
  %v1314 = vtanh.pop %v1310
  %v1315 = vtanh.pop %v1311
  %v1316 = vtanh.pop %v1312
  %v1317 = vtanh.pop %v1313
  %v1318 = vmul.f32 %v1298, %v1314
  %v1319 = vmul.f32 %v1299, %v1315
  %v1320 = vmul.f32 %v1300, %v1316
  %v1321 = vmul.f32 %v1301, %v1317
  %s1322 = scalar_lea.vmem %s0, 448
  %v1323 = vld [vmem:[%s1322] sm:$0xf]
  %v1324 = vld [vmem:[%s1322 + $0x4] sm:$0xf]
  %v1325 = vld [vmem:[%s1322 + $0x8] sm:$0xf]
  %v1326 = vld [vmem:[%s1322 + $0xc] sm:$0xf]
  %v1327 = vld [vmem:[%s1322 + $0x10] sm:$0xf]
  %v1328 = vld [vmem:[%s1322 + $0x14] sm:$0xf]
  %v1329 = vld [vmem:[%s1322 + $0x18] sm:$0xf]
  %v1330 = vld [vmem:[%s1322 + $0x1c] sm:$0xf]
  %v1331 = vld [vmem:[%s1322 + $0x20] sm:$0xf]
  %v1332 = vld [vmem:[%s1322 + $0x24] sm:$0xf]
  %v1333 = vld [vmem:[%s1322 + $0x28] sm:$0xf]
  %v1334 = vld [vmem:[%s1322 + $0x2c] sm:$0xf]
  %v1335 = vld [vmem:[%s1322 + $0x30] sm:$0xf]
  %v1336 = vld [vmem:[%s1322 + $0x34] sm:$0xf]
  %v1337 = vld [vmem:[%s1322 + $0x38] sm:$0xf]
  %v1338 = vld [vmem:[%s1322 + $0x3c] sm:$0xf]
  %v1339 = vunpack.c.l.bf16 %v1323
  %v1340 = vunpack.c.l.bf16 %v1324
  %v1341 = vunpack.c.l.bf16 %v1325
  %v1342 = vunpack.c.l.bf16 %v1326
  %v1343 = vunpack.c.l.bf16 %v1327
  %v1344 = vunpack.c.l.bf16 %v1328
  %v1345 = vunpack.c.l.bf16 %v1329
  %v1346 = vunpack.c.l.bf16 %v1330
  %v1347 = vunpack.c.l.bf16 %v1331
  %v1348 = vunpack.c.l.bf16 %v1332
  %v1349 = vunpack.c.l.bf16 %v1333
  %v1350 = vunpack.c.l.bf16 %v1334
  %v1351 = vunpack.c.l.bf16 %v1335
  %v1352 = vunpack.c.l.bf16 %v1336
  %v1353 = vunpack.c.l.bf16 %v1337
  %v1354 = vunpack.c.l.bf16 %v1338
  %v1355 = vpack.c.bf16 %v1319, %v1318
  %v1356 = vpack.c.bf16 %v1321, %v1320
  %1357 = vmatpush.bf16.msra.mxu0 0
  %1358 = vmatpush.bf16.msra.mxu0 0
  %1359 = vmatpush.bf16.msra.mxu0 0
  %1360 = vmatpush.bf16.msra.mxu0 0
  %1361 = vmatpush.bf16.msra.mxu0 0
  %1362 = vmatpush.bf16.msra.mxu0 0
  %1363 = vmatpush.bf16.msra.mxu0 %v1356
  %1364 = vmatpush.bf16.msra.mxu0 %v1355
  %1365 = vmatmul.bf16.gmra.mxu0 %v130
  %v1366 = vpop.f32.mrf.mxu0
  %v1367 = vadd.f32 0.0, %v1366
  %v1368 = vpop.f32.mrf.mxu0
  %v1369 = vadd.f32 0.0, %v1368
  %1370 = vmatmul.bf16.gmra.mxu0 %v133
  %v1371 = vpop.f32.mrf.mxu0
  %v1372 = vadd.f32 0.0, %v1371
  %v1373 = vpop.f32.mrf.mxu0
  %v1374 = vadd.f32 0.0, %v1373
  %1375 = vmatmul.bf16.gmra.mxu0 %v136
  %v1376 = vpop.f32.mrf.mxu0
  %v1377 = vadd.f32 0.0, %v1376
  %v1378 = vpop.f32.mrf.mxu0
  %v1379 = vadd.f32 0.0, %v1378
  %1380 = vmatmul.bf16.gmra.mxu0 %v139
  %v1381 = vpop.f32.mrf.mxu0
  %v1382 = vadd.f32 0.0, %v1381
  %v1383 = vpop.f32.mrf.mxu0
  %v1384 = vadd.f32 0.0, %v1383
  %1385 = vmatmul.bf16.gmra.mxu0 %v142
  %v1386 = vpop.f32.mrf.mxu0
  %v1387 = vadd.f32 0.0, %v1386
  %v1388 = vpop.f32.mrf.mxu0
  %v1389 = vadd.f32 0.0, %v1388
  %1390 = vmatmul.bf16.gmra.mxu0 %v145
  %v1391 = vpop.f32.mrf.mxu0
  %v1392 = vadd.f32 0.0, %v1391
  %v1393 = vpop.f32.mrf.mxu0
  %v1394 = vadd.f32 0.0, %v1393
  %1395 = vmatmul.bf16.gmra.mxu0 %v148
  %v1396 = vpop.f32.mrf.mxu0
  %v1397 = vadd.f32 0.0, %v1396
  %v1398 = vpop.f32.mrf.mxu0
  %v1399 = vadd.f32 0.0, %v1398
  %1400 = vmatmul.bf16.gmra.mxu0 %v151
  %v1401 = vpop.f32.mrf.mxu0
  %v1402 = vadd.f32 0.0, %v1401
  %v1403 = vpop.f32.mrf.mxu0
  %v1404 = vadd.f32 0.0, %v1403
  %1405 = vdwg.mxu0
  %v1406 = vadd.f32 %v1339, %v1367
  %v1407 = vadd.f32 %v1340, %v1369
  %v1408 = vadd.f32 %v1341, %v1372
  %v1409 = vadd.f32 %v1342, %v1374
  %v1410 = vadd.f32 %v1343, %v1377
  %v1411 = vadd.f32 %v1344, %v1379
  %v1412 = vadd.f32 %v1345, %v1382
  %v1413 = vadd.f32 %v1346, %v1384
  %v1414 = vadd.f32 %v1347, %v1387
  %v1415 = vadd.f32 %v1348, %v1389
  %v1416 = vadd.f32 %v1349, %v1392
  %v1417 = vadd.f32 %v1350, %v1394
  %v1418 = vadd.f32 %v1351, %v1397
  %v1419 = vadd.f32 %v1352, %v1399
  %v1420 = vadd.f32 %v1353, %v1402
  %v1421 = vadd.f32 %v1354, %v1404
  %v1422 = vmul.f32 %v1406, 0.5
  %v1423 = vmul.f32 %v1407, 0.5
  %v1424 = vmul.f32 %v1408, 0.5
  %v1425 = vmul.f32 %v1409, 0.5
  %v1426 = vtanh.pop %v1422
  %v1427 = vtanh.pop %v1423
  %v1428 = vtanh.pop %v1424
  %v1429 = vtanh.pop %v1425
  %v1430 = vmul.f32 %v1426, 0.5
  %v1431 = vmul.f32 %v1427, 0.5
  %v1432 = vmul.f32 %v1428, 0.5
  %v1433 = vmul.f32 %v1429, 0.5
  %v1434 = vadd.f32 %v1430, 0.5
  %v1435 = vadd.f32 %v1431, 0.5
  %v1436 = vadd.f32 %v1432, 0.5
  %v1437 = vadd.f32 %v1433, 0.5
  %v1438 = vmul.f32 %v1410, 0.5
  %v1439 = vmul.f32 %v1411, 0.5
  %v1440 = vmul.f32 %v1412, 0.5
  %v1441 = vmul.f32 %v1413, 0.5
  %v1442 = vtanh.pop %v1438
  %v1443 = vtanh.pop %v1439
  %v1444 = vtanh.pop %v1440
  %v1445 = vtanh.pop %v1441
  %v1446 = vmul.f32 %v1442, 0.5
  %v1447 = vmul.f32 %v1443, 0.5
  %v1448 = vmul.f32 %v1444, 0.5
  %v1449 = vmul.f32 %v1445, 0.5
  %v1450 = vadd.f32 %v1446, 0.5
  %v1451 = vadd.f32 %v1447, 0.5
  %v1452 = vadd.f32 %v1448, 0.5
  %v1453 = vadd.f32 %v1449, 0.5
  %v1454 = vtanh.pop %v1414
  %v1455 = vtanh.pop %v1415
  %v1456 = vtanh.pop %v1416
  %v1457 = vtanh.pop %v1417
  %v1458 = vmul.f32 %v1418, 0.5
  %v1459 = vmul.f32 %v1419, 0.5
  %v1460 = vmul.f32 %v1420, 0.5
  %v1461 = vmul.f32 %v1421, 0.5
  %v1462 = vtanh.pop %v1458
  %v1463 = vtanh.pop %v1459
  %v1464 = vtanh.pop %v1460
  %v1465 = vtanh.pop %v1461
  %v1466 = vmul.f32 %v1462, 0.5
  %v1467 = vmul.f32 %v1463, 0.5
  %v1468 = vmul.f32 %v1464, 0.5
  %v1469 = vmul.f32 %v1465, 0.5
  %v1470 = vadd.f32 %v1466, 0.5
  %v1471 = vadd.f32 %v1467, 0.5
  %v1472 = vadd.f32 %v1468, 0.5
  %v1473 = vadd.f32 %v1469, 0.5
  %v1474 = vmul.f32 %v1450, %v1310
  %v1475 = vmul.f32 %v1451, %v1311
  %v1476 = vmul.f32 %v1452, %v1312
  %v1477 = vmul.f32 %v1453, %v1313
  %v1478 = vmul.f32 %v1434, %v1454
  %v1479 = vmul.f32 %v1435, %v1455
  %v1480 = vmul.f32 %v1436, %v1456
  %v1481 = vmul.f32 %v1437, %v1457
  %v1482 = vadd.f32 %v1474, %v1478
  %v1483 = vadd.f32 %v1475, %v1479
  %v1484 = vadd.f32 %v1476, %v1480
  %v1485 = vadd.f32 %v1477, %v1481
  %v1486 = vtanh.pop %v1482
  %v1487 = vtanh.pop %v1483
  %v1488 = vtanh.pop %v1484
  %v1489 = vtanh.pop %v1485
  %v1490 = vmul.f32 %v1470, %v1486
  %v1491 = vmul.f32 %v1471, %v1487
  %v1492 = vmul.f32 %v1472, %v1488
  %v1493 = vmul.f32 %v1473, %v1489
  %1494 = vst [vmem:[#allocation2] sm:$0xff] %v1490
  %1495 = vst [vmem:[#allocation2 + $0x8] sm:$0xff] %v1491
  %1496 = vst [vmem:[#allocation2 + $0x10] sm:$0xff] %v1492
  %1497 = vst [vmem:[#allocation2 + $0x18] sm:$0xff] %v1493
  %1498 = vst [vmem:[#allocation3] sm:$0xff] %v1482
  %1499 = vst [vmem:[#allocation3 + $0x8] sm:$0xff] %v1483
  %1500 = vst [vmem:[#allocation3 + $0x10] sm:$0xff] %v1484
  %1501 = vst [vmem:[#allocation3 + $0x18] sm:$0xff] %v1485
  // Predicated region
  $region22: #{lstm_classifier_forward.1} parent=0 // pred_check
    %p1502 = pneg %p18
  $region23: #{lstm_classifier_forward.1} parent=0 // pred_check_branch
    %1504 = sbr.rel (%p1502) target = $region25
  $region24: #{lstm_classifier_forward.1} parent=0 // pred_region
    %v1505 = vld [vmem:[%s2] sm:$0xf]
    %v1506 = vld [vmem:[%s2 + $0x4] sm:$0xf]
    %v1507 = vpack.c.bf16 %v1491, %v1490
    %v1508 = vpack.c.bf16 %v1493, %v1492
    %v1509 = vld [vmem:[%s3] sm:$0xff]
    %v1510 = vld [vmem:[%s3 + $0x8] sm:$0xff]
    %1512 = vset.pattern.permute.xlu0 0
    %1513 = vperm.xlu0 %1512, %v1509
    %v1514 = vpop.permute.xlu0 %1513
    %1517 = vset.pattern.permute.xlu0 0
    %1518 = vperm.xlu0 %1517, %v1510
    %v1519 = vpop.permute.xlu0 %1518
    %v1523 = vunpack.c.l.b16 %v1505
    %v1524 = vunpack.c.l.b16 %v1506
    %v1525 = vpack.c.b16 %v1524, %v1523
    %v1527 = vsel %vm128, %v1525, 0
    %1529 = vmatpush.bf16.msra.mxu0 0
    %1530 = vmatpush.bf16.msra.mxu0 0
    %1531 = vmatpush.bf16.msra.mxu0 0
    %1532 = vmatpush.bf16.msra.mxu0 0
    %1533 = vmatpush.bf16.msra.mxu0 0
    %1534 = vmatpush.bf16.msra.mxu0 0
    %1535 = vmatpush.bf16.msra.mxu0 %v1508
    %1536 = vmatpush.bf16.msra.mxu0 %v1507
    %1537 = vmatmul.bf16.gmra.mxu0 %v1527
    %v1538 = vpop.f32.mrf.mxu0
    %v1539 = vadd.f32 %v1514, %v1538
    %v1540 = vpop.f32.mrf.mxu0
    %v1541 = vadd.f32 %v1519, %v1540
    %1542 = vdwg.mxu0
    %v1543 = vpack.c.bf16 %v1539, %v1539
    %v1544 = vpack.c.bf16 %v1541, %v1541
    %1545 = vst [vmem:[%s4] sm:$0xf] %v1543
    %1546 = vst [vmem:[%s4 + $0x4] sm:$0xf] %v1544
  $region25: #{lstm_classifier_forward.1} parent=0 // pred_fallthru
    _
  // Predicated region
  $region26: #{lstm_classifier_forward.1} parent=0 // pred_check
    _
  $region27: #{lstm_classifier_forward.1} parent=0 // pred_check_branch
    %1548 = sbr.rel (0) target = $region29
  $region28: #{lstm_classifier_forward.1} parent=0 // pred_region
    _
  $region29: #{lstm_classifier_forward.1} parent=0 // pred_fallthru
    _
  // Predicated region
  $region30: #{lstm_classifier_forward.1} parent=0 // pred_check
    _
  $region31: #{lstm_classifier_forward.1} parent=0 // pred_check_branch
    %1550 = sbr.rel (0) target = $region33
  $region32: #{lstm_classifier_forward.1} parent=0 // pred_region
    _
  $region33: #{lstm_classifier_forward.1} parent=0 // pred_fallthru
    _

</llo_original>
